<compile_context>
chip_gen: v6e
topology: v6e:2x2x1
jax: 0.10.0
libtpu: 0.0.40
codegen_flags: <defaults>
</compile_context>

<pallas_src>
import functools

import jax
import jax.numpy as jnp
import numpy as np
from jax import lax
from jax.experimental import pallas as pl
from jax.experimental.pallas import tpu as pltpu


# -----------------------------------------------------------------------------
# Kernel: one (batch block b, layer l) grid step.  All per-layer params arrive
# already sliced to layer l by their BlockSpecs (leading L axis squeezed).
# -----------------------------------------------------------------------------
def _skip_connect_kernel(x_ref,
                         ln_g_ref, ln_b_ref,
                         w_v_ref, b_v_ref, w_g_ref, b_g_ref,
                         w_qk_ref, b_qk_ref,
                         osq_g_ref, osq_b_ref, osk_g_ref, osk_b_ref,
                         w_o_ref, b_o_ref,
                         o_ref,
                         x_cur_ref, x_skip_ref):
    l = pl.program_id(1)
    n_layers = pl.num_programs(1)

    # Start of a new batch block: load the input activation into VMEM scratch.
    @pl.when(l == 0)
    def _():
        x_cur_ref[...] = x_ref[...].astype(jnp.float32)

    x = x_cur_ref[...]                                       # (S, D) f32

    # ---- LayerNorm(in_features), eps=1e-5, affine ----------------------------
    mu = jnp.mean(x, axis=-1, keepdims=True)
    var = jnp.mean(jnp.square(x - mu), axis=-1, keepdims=True)
    n = (x - mu) * lax.rsqrt(var + 1e-5)
    n = n * ln_g_ref[...] + ln_b_ref[...]                    # (S, D) f32
    n_bf = n.astype(jnp.bfloat16)

    # ---- to_hidden: column-split Linear(D, 2E) + SiLU (bf16 MXU, f32 acc) ----
    v = jnp.dot(n_bf, w_v_ref[...],
                preferred_element_type=jnp.float32) + b_v_ref[...]
    v = v * jax.nn.sigmoid(v)                                # (S, E) f32
    g = jnp.dot(n_bf, w_g_ref[...],
                preferred_element_type=jnp.float32) + b_g_ref[...]
    g = g * jax.nn.sigmoid(g)                                # (S, E) f32

    # ---- to_qk: Linear(D, Dk) + SiLU, OffsetScale (1/seq_len folded into q) --
    qk = jnp.dot(n_bf, w_qk_ref[...],
                 preferred_element_type=jnp.float32) + b_qk_ref[...]
    qk = qk * jax.nn.sigmoid(qk)                             # (S, Dk) f32
    q = qk * osq_g_ref[...] + osq_b_ref[...]                 # pre-scaled by 1/S
    k = qk * osk_g_ref[...] + osk_b_ref[...]

    # ---- ReLU^2 attention inside this batch block (no mask needed) -----------
    sim = lax.dot_general(q.astype(jnp.bfloat16), k.astype(jnp.bfloat16),
                          (((1,), (1,)), ((), ())),
                          preferred_element_type=jnp.float32)        # (S, S)
    attn = jnp.square(jnp.maximum(sim, 0.0))

    out = jnp.dot(attn.astype(jnp.bfloat16), v.astype(jnp.bfloat16),
                  preferred_element_type=jnp.float32) * g            # (S, E)
    out = jnp.dot(out.astype(jnp.bfloat16), w_o_ref[...],
                  preferred_element_type=jnp.float32) + b_o_ref[...]
    y = out + x                                              # add_residual=True

    # ---- SkipConnect bookkeeping (matches the PyTorch control flow) ----------
    do_skip = jnp.logical_and(jnp.logical_and(l >= 1, (l % 2) == 0),
                              l != n_layers - 1)

    @pl.when(do_skip)
    def _():
        z = y + x_skip_ref[...]
        x_cur_ref[...] = z
        x_skip_ref[...] = z

    @pl.when(jnp.logical_not(do_skip))
    def _():
        x_cur_ref[...] = y

    @pl.when(l == 0)
    def _():
        x_skip_ref[...] = y          # x_ = x.clone().detach(): forward copy

    @pl.when(l == n_layers - 1)
    def _():
        o_ref[...] = x_cur_ref[...].astype(o_ref.dtype)


# -----------------------------------------------------------------------------
# Parameter prep: stack per-layer params on a leading L axis, split W_uv/b_uv
# into v/gate halves, fold 1/seq_len into the q OffsetScale affine, store the
# big projection weights as bf16 (biases / LN / OffsetScale stay f32).
# -----------------------------------------------------------------------------
def _prepare_params(layer_params, seq_len):
    E = layer_params[0]["w_o"].shape[0]
    inv_s = 1.0 / float(seq_len)
    stack = lambda fn: jnp.stack([fn(p) for p in layer_params])
    bf16 = jnp.bfloat16
    return {
        "ln_g": stack(lambda p: p["ln_g"]),                        # (L, 1, D)
        "ln_b": stack(lambda p: p["ln_b"]),                        # (L, 1, D)
        "w_v": stack(lambda p: p["w_uv"][:, :E]).astype(bf16),     # (L, D, E)
        "b_v": stack(lambda p: p["b_uv"][:, :E]),                  # (L, 1, E)
        "w_g": stack(lambda p: p["w_uv"][:, E:]).astype(bf16),     # (L, D, E)
        "b_g": stack(lambda p: p["b_uv"][:, E:]),                  # (L, 1, E)
        "w_qk": stack(lambda p: p["w_qk"]).astype(bf16),           # (L, D, Dk)
        "b_qk": stack(lambda p: p["b_qk"]),                        # (L, 1, Dk)
        "osq_g": stack(lambda p: p["os_g"][0:1] * inv_s),          # (L, 1, Dk)
        "osq_b": stack(lambda p: p["os_b"][0:1] * inv_s),          # (L, 1, Dk)
        "osk_g": stack(lambda p: p["os_g"][1:2]),                  # (L, 1, Dk)
        "osk_b": stack(lambda p: p["os_b"][1:2]),                  # (L, 1, Dk)
        "w_o": stack(lambda p: p["w_o"]).astype(bf16),             # (L, E, D)
        "b_o": stack(lambda p: p["b_o"]),                          # (L, 1, D)
    }


def _vmem_limit_bytes(S, D, E, Dk):
    f32, bf16 = 4, 2
    acts = 4 * S * D * f32                                  # x in, out, 2 scratch
    layer_w = (2 * D * E + D * Dk + E * D) * bf16 \
              + (3 * D + 2 * E + 4 * Dk) * f32              # weights + small vecs
    temps = (S * S + 3 * S * E + 3 * S * Dk + 2 * S * D) * f32
    need = acts + 2 * layer_w + temps                       # 2x: double-buffered
    return int(min(64 * 1024 * 1024, max(32 * 1024 * 1024, 2 * need)))


def skip_connect_forward(x, layer_params):
    """x: (B, S, D) float32.  layer_params: list of per-layer GAU param dicts."""
    B, S, D = x.shape
    level = len(layer_params)
    E = layer_params[0]["w_o"].shape[0]
    Dk = layer_params[0]["w_qk"].shape[1]
    p = _prepare_params(layer_params, S)

    def w_spec(arr):
        # Per-layer block: leading L axis squeezed, same block for every batch.
        return pl.BlockSpec((None, arr.shape[1], arr.shape[2]),
                            lambda b, l: (l, 0, 0))

    x_spec = pl.BlockSpec((None, S, D), lambda b, l: (b, 0, 0))

    inputs = (x,
              p["ln_g"], p["ln_b"],
              p["w_v"], p["b_v"], p["w_g"], p["b_g"],
              p["w_qk"], p["b_qk"],
              p["osq_g"], p["osq_b"], p["osk_g"], p["osk_b"],
              p["w_o"], p["b_o"])
    in_specs = [x_spec] + [w_spec(a) for a in inputs[1:]]

    out = pl.pallas_call(
        _skip_connect_kernel,
        out_shape=jax.ShapeDtypeStruct((B, S, D), x.dtype),
        grid=(B, level),
        in_specs=in_specs,
        out_specs=pl.BlockSpec((None, S, D), lambda b, l: (b, 0, 0)),
        scratch_shapes=[pltpu.VMEM((S, D), jnp.float32),   # running activation
                        pltpu.VMEM((S, D), jnp.float32)],  # skip tensor
        compiler_params=pltpu.CompilerParams(
            dimension_semantics=("parallel", "arbitrary"),
            vmem_limit_bytes=_vmem_limit_bytes(S, D, E, Dk)),
    )(*inputs)
    return out


# -----------------------------------------------------------------------------
# Deterministic parameter construction + pure-JAX f32 reference for validation.
# -----------------------------------------------------------------------------
def init_gau_params(key, in_features, query_key_dim=16, expansion_factor=2):
    D = in_features
    E = int(expansion_factor * D)
    ks = jax.random.split(key, 6)
    s = 0.05
    return {
        "ln_g": jnp.ones((1, D), jnp.float32),
        "ln_b": jnp.zeros((1, D), jnp.float32),
        "w_uv": s * jax.random.normal(ks[0], (D, 2 * E), jnp.float32),
        "b_uv": 0.01 * jax.random.normal(ks[1], (1, 2 * E), jnp.float32),
        "w_qk": s * jax.random.normal(ks[2], (D, query_key_dim), jnp.float32),
        "b_qk": 0.01 * jax.random.normal(ks[3], (1, query_key_dim), jnp.float32),
        "os_g": jnp.ones((2, query_key_dim), jnp.float32),
        "os_b": jnp.zeros((2, query_key_dim), jnp.float32),
        "w_o": s * jax.random.normal(ks[4], (E, D), jnp.float32),
        "b_o": 0.01 * jax.random.normal(ks[5], (1, D), jnp.float32),
    }


def _gau_ref(x, p):
    mu = jnp.mean(x, -1, keepdims=True)
    var = jnp.mean(jnp.square(x - mu), -1, keepdims=True)
    n = (x - mu) / jnp.sqrt(var + 1e-5) * p["ln_g"][0] + p["ln_b"][0]
    uv = n @ p["w_uv"] + p["b_uv"][0]
    uv = uv * jax.nn.sigmoid(uv)
    E = p["w_o"].shape[0]
    v, gate = uv[..., :E], uv[..., E:]
    qk = n @ p["w_qk"] + p["b_qk"][0]
    qk = qk * jax.nn.sigmoid(qk)
    q = qk * p["os_g"][0] + p["os_b"][0]
    k = qk * p["os_g"][1] + p["os_b"][1]
    sim = jnp.einsum("bid,bjd->bij", q, k) / x.shape[-2]
    attn = jnp.square(jnp.maximum(sim, 0.0))
    out = jnp.einsum("bij,bjd->bid", attn, v) * gate
    return out @ p["w_o"] + p["b_o"][0] + x


def _skip_connect_ref(x, layer_params):
    level = len(layer_params)
    x = _gau_ref(x, layer_params[0])
    if level > 1:
        x_ = x
        for i in range(1, level):
            x = _gau_ref(x, layer_params[i])
            if i % 2 == 0 and i != level - 1:
                x = x + x_
                x_ = x
    return x


if __name__ == "__main__":
    B, S, D = 2, 8, 32          # batch, seq_len, in_features
    QK_DIM = 16                 # query/key dim of each GAU

    key = jax.random.PRNGKey(0)
    key, xkey = jax.random.split(key)
    x = jax.random.normal(xkey, (B, S, D), jnp.float32)

    # level=2 (SkipConnect default) and level=4 (exercises the i%2==0 skip add).
    for level in (2, 4):
        layer_keys = jax.random.split(key, level)
        layer_params = [init_gau_params(layer_keys[i], D, QK_DIM)
                        for i in range(level)]
        out = jax.block_until_ready(skip_connect_forward(x, layer_params))
        ref = _skip_connect_ref(x, layer_params)
        # bf16 matmul operands (f32 accumulation) => looser tolerance than f32.
        np.testing.assert_allclose(np.asarray(out), np.asarray(ref),
                                   rtol=1e-2, atol=1e-2)
        assert out.shape == (B, S, D)

    print("KERNEL_OK")
</pallas_src>

<mosaic_0001>
module attributes {stable_mosaic.version = 11 : i64} {
  func.func @_skip_connect_kernel(%arg0: i32, %arg1: i32, %arg2: memref<1x8x32xf32, #tpu.memory_space<vmem>>, %arg3: memref<1x1x32xf32, #tpu.memory_space<vmem>>, %arg4: memref<1x1x32xf32, #tpu.memory_space<vmem>>, %arg5: memref<1x32x64xbf16, #tpu.memory_space<vmem>>, %arg6: memref<1x1x64xf32, #tpu.memory_space<vmem>>, %arg7: memref<1x32x64xbf16, #tpu.memory_space<vmem>>, %arg8: memref<1x1x64xf32, #tpu.memory_space<vmem>>, %arg9: memref<1x32x16xbf16, #tpu.memory_space<vmem>>, %arg10: memref<1x1x16xf32, #tpu.memory_space<vmem>>, %arg11: memref<1x1x16xf32, #tpu.memory_space<vmem>>, %arg12: memref<1x1x16xf32, #tpu.memory_space<vmem>>, %arg13: memref<1x1x16xf32, #tpu.memory_space<vmem>>, %arg14: memref<1x1x16xf32, #tpu.memory_space<vmem>>, %arg15: memref<1x64x32xbf16, #tpu.memory_space<vmem>>, %arg16: memref<1x1x32xf32, #tpu.memory_space<vmem>>, %arg17: memref<1x8x32xf32, #tpu.memory_space<vmem>>, %arg18: memref<8x32xf32, #tpu.memory_space<vmem>>, %arg19: memref<8x32xf32, #tpu.memory_space<vmem>>) attributes {dimension_semantics = [#tpu.dimension_semantics<parallel>, #tpu.dimension_semantics<arbitrary>], iteration_bounds = array<i64: 2, 2>, scalar_prefetch = 0 : i64, scratch_operands = 2 : i64, tpu.core_type = #tpu.core_type<tc>, window_params = [{transform_indices = @transform_0, window_bounds = array<i64: 1, 8, 32>}, {transform_indices = @transform_1, window_bounds = array<i64: 1, 1, 32>}, {transform_indices = @transform_2, window_bounds = array<i64: 1, 1, 32>}, {transform_indices = @transform_3, window_bounds = array<i64: 1, 32, 64>}, {transform_indices = @transform_4, window_bounds = array<i64: 1, 1, 64>}, {transform_indices = @transform_5, window_bounds = array<i64: 1, 32, 64>}, {transform_indices = @transform_6, window_bounds = array<i64: 1, 1, 64>}, {transform_indices = @transform_7, window_bounds = array<i64: 1, 32, 16>}, {transform_indices = @transform_8, window_bounds = array<i64: 1, 1, 16>}, {transform_indices = @transform_9, window_bounds = array<i64: 1, 1, 16>}, {transform_indices = @transform_10, window_bounds = array<i64: 1, 1, 16>}, {transform_indices = @transform_11, window_bounds = array<i64: 1, 1, 16>}, {transform_indices = @transform_12, window_bounds = array<i64: 1, 1, 16>}, {transform_indices = @transform_13, window_bounds = array<i64: 1, 64, 32>}, {transform_indices = @transform_14, window_bounds = array<i64: 1, 1, 32>}, {transform_indices = @transform_15, window_bounds = array<i64: 1, 8, 32>}]} {
    %c0_i32 = arith.constant 0 : i32
    %0 = arith.cmpi eq, %arg1, %c0_i32 : i32
    %1 = arith.extui %0 : i1 to i32
    %c0_i32_0 = arith.constant 0 : i32
    %2 = arith.cmpi ne, %1, %c0_i32_0 : i32
    scf.if %2 {
      %c0_71 = arith.constant 0 : index
      %c0_72 = arith.constant 0 : index
      %c0_73 = arith.constant 0 : index
      %131 = vector.load %arg2[%c0_71, %c0_72, %c0_73] : memref<1x8x32xf32, #tpu.memory_space<vmem>>, vector<1x8x32xf32>
      %132 = vector.shape_cast %131 : vector<1x8x32xf32> to vector<8x32xf32>
      %c0_74 = arith.constant 0 : index
      %c0_75 = arith.constant 0 : index
      %133 = vector.load %arg18[%c0_74, %c0_75] : memref<8x32xf32, #tpu.memory_space<vmem>>, vector<8x32xf32>
      tpu.vector_store %arg18[%c0_74, %c0_75], %132 {strides = array<i32>} : memref<8x32xf32, #tpu.memory_space<vmem>>, vector<8x32xf32>,
    } else {
    }
    %c0 = arith.constant 0 : index
    %c0_1 = arith.constant 0 : index
    %3 = vector.load %arg18[%c0, %c0_1] : memref<8x32xf32, #tpu.memory_space<vmem>>, vector<8x32xf32>
    %cst = arith.constant dense<0.000000e+00> : vector<8xf32>
    %4 = vector.multi_reduction <add>, %3, %cst [1] : vector<8x32xf32> to vector<8xf32>
    %5 = vector.shape_cast %4 : vector<8xf32> to vector<8x1xf32>
    %cst_2 = arith.constant 3.200000e+01 : f32
    %6 = vector.broadcast %cst_2 : f32 to vector<8x1xf32>
    %7 = arith.divf %5, %6 : vector<8x1xf32>
    %8 = vector.broadcast %7 : vector<8x1xf32> to vector<8x32xf32>
    %9 = arith.subf %3, %8 : vector<8x32xf32>
    %10 = arith.mulf %9, %9 : vector<8x32xf32>
    %cst_3 = arith.constant dense<0.000000e+00> : vector<8xf32>
    %11 = vector.multi_reduction <add>, %10, %cst_3 [1] : vector<8x32xf32> to vector<8xf32>
    %12 = vector.shape_cast %11 : vector<8xf32> to vector<8x1xf32>
    %cst_4 = arith.constant 3.200000e+01 : f32
    %13 = vector.broadcast %cst_4 : f32 to vector<8x1xf32>
    %14 = arith.divf %12, %13 : vector<8x1xf32>
    %15 = vector.broadcast %7 : vector<8x1xf32> to vector<8x32xf32>
    %16 = arith.subf %3, %15 : vector<8x32xf32>
    %cst_5 = arith.constant 9.99999974E-6 : f32
    %17 = vector.broadcast %cst_5 : f32 to vector<8x1xf32>
    %18 = arith.addf %14, %17 : vector<8x1xf32>
    %19 = math.rsqrt %18 : vector<8x1xf32>
    %20 = vector.broadcast %19 : vector<8x1xf32> to vector<8x32xf32>
    %21 = arith.mulf %16, %20 : vector<8x32xf32>
    %c0_6 = arith.constant 0 : index
    %c0_7 = arith.constant 0 : index
    %c0_8 = arith.constant 0 : index
    %22 = vector.load %arg3[%c0_6, %c0_7, %c0_8] : memref<1x1x32xf32, #tpu.memory_space<vmem>>, vector<1x1x32xf32>
    %23 = vector.shape_cast %22 : vector<1x1x32xf32> to vector<1x32xf32>
    %24 = vector.broadcast %23 : vector<1x32xf32> to vector<8x32xf32>
    %25 = arith.mulf %21, %24 : vector<8x32xf32>
    %c0_9 = arith.constant 0 : index
    %c0_10 = arith.constant 0 : index
    %c0_11 = arith.constant 0 : index
    %26 = vector.load %arg4[%c0_9, %c0_10, %c0_11] : memref<1x1x32xf32, #tpu.memory_space<vmem>>, vector<1x1x32xf32>
    %27 = vector.shape_cast %26 : vector<1x1x32xf32> to vector<1x32xf32>
    %28 = vector.broadcast %27 : vector<1x32xf32> to vector<8x32xf32>
    %29 = arith.addf %25, %28 : vector<8x32xf32>
    %30 = arith.truncf %29 : vector<8x32xf32> to vector<8x32xbf16>
    %c0_12 = arith.constant 0 : index
    %c0_13 = arith.constant 0 : index
    %c0_14 = arith.constant 0 : index
    %31 = vector.load %arg5[%c0_12, %c0_13, %c0_14] : memref<1x32x64xbf16, #tpu.memory_space<vmem>>, vector<1x32x64xbf16>
    %32 = vector.shape_cast %31 : vector<1x32x64xbf16> to vector<32x64xbf16>
    %cst_15 = arith.constant dense<0.000000e+00> : vector<8x64xf32>
    %33 = tpu.matmul %30, %32, %cst_15 {dimension_numbers = #tpu.dot_dimension_numbers<[1], [0], [0], [1], [0, 0, 1, 1], [], []>} : vector<8x32xbf16>, vector<32x64xbf16>, vector<8x64xf32> -> vector<8x64xf32>
    %c0_16 = arith.constant 0 : index
    %c0_17 = arith.constant 0 : index
    %c0_18 = arith.constant 0 : index
    %34 = vector.load %arg6[%c0_16, %c0_17, %c0_18] : memref<1x1x64xf32, #tpu.memory_space<vmem>>, vector<1x1x64xf32>
    %35 = vector.shape_cast %34 : vector<1x1x64xf32> to vector<1x64xf32>
    %36 = vector.broadcast %35 : vector<1x64xf32> to vector<8x64xf32>
    %37 = arith.addf %33, %36 : vector<8x64xf32>
    %38 = arith.negf %37 : vector<8x64xf32>
    %39 = math.exp %38 : vector<8x64xf32>
    %cst_19 = arith.constant 1.000000e+00 : f32
    %40 = vector.broadcast %cst_19 : f32 to vector<8x64xf32>
    %41 = arith.addf %40, %39 : vector<8x64xf32>
    %42 = arith.divf %40, %41 : vector<8x64xf32>
    %43 = arith.mulf %37, %42 : vector<8x64xf32>
    %c0_20 = arith.constant 0 : index
    %c0_21 = arith.constant 0 : index
    %c0_22 = arith.constant 0 : index
    %44 = vector.load %arg7[%c0_20, %c0_21, %c0_22] : memref<1x32x64xbf16, #tpu.memory_space<vmem>>, vector<1x32x64xbf16>
    %45 = vector.shape_cast %44 : vector<1x32x64xbf16> to vector<32x64xbf16>
    %cst_23 = arith.constant dense<0.000000e+00> : vector<8x64xf32>
    %46 = tpu.matmul %30, %45, %cst_23 {dimension_numbers = #tpu.dot_dimension_numbers<[1], [0], [0], [1], [0, 0, 1, 1], [], []>} : vector<8x32xbf16>, vector<32x64xbf16>, vector<8x64xf32> -> vector<8x64xf32>
    %c0_24 = arith.constant 0 : index
    %c0_25 = arith.constant 0 : index
    %c0_26 = arith.constant 0 : index
    %47 = vector.load %arg8[%c0_24, %c0_25, %c0_26] : memref<1x1x64xf32, #tpu.memory_space<vmem>>, vector<1x1x64xf32>
    %48 = vector.shape_cast %47 : vector<1x1x64xf32> to vector<1x64xf32>
    %49 = vector.broadcast %48 : vector<1x64xf32> to vector<8x64xf32>
    %50 = arith.addf %46, %49 : vector<8x64xf32>
    %51 = arith.negf %50 : vector<8x64xf32>
    %52 = math.exp %51 : vector<8x64xf32>
    %cst_27 = arith.constant 1.000000e+00 : f32
    %53 = vector.broadcast %cst_27 : f32 to vector<8x64xf32>
    %54 = arith.addf %53, %52 : vector<8x64xf32>
    %55 = arith.divf %53, %54 : vector<8x64xf32>
    %56 = arith.mulf %50, %55 : vector<8x64xf32>
    %c0_28 = arith.constant 0 : index
    %c0_29 = arith.constant 0 : index
    %c0_30 = arith.constant 0 : index
    %57 = vector.load %arg9[%c0_28, %c0_29, %c0_30] : memref<1x32x16xbf16, #tpu.memory_space<vmem>>, vector<1x32x16xbf16>
    %58 = vector.shape_cast %57 : vector<1x32x16xbf16> to vector<32x16xbf16>
    %cst_31 = arith.constant dense<0.000000e+00> : vector<8x16xf32>
    %59 = tpu.matmul %30, %58, %cst_31 {dimension_numbers = #tpu.dot_dimension_numbers<[1], [0], [0], [1], [0, 0, 1, 1], [], []>} : vector<8x32xbf16>, vector<32x16xbf16>, vector<8x16xf32> -> vector<8x16xf32>
    %c0_32 = arith.constant 0 : index
    %c0_33 = arith.constant 0 : index
    %c0_34 = arith.constant 0 : index
    %60 = vector.load %arg10[%c0_32, %c0_33, %c0_34] : memref<1x1x16xf32, #tpu.memory_space<vmem>>, vector<1x1x16xf32>
    %61 = vector.shape_cast %60 : vector<1x1x16xf32> to vector<1x16xf32>
    %62 = vector.broadcast %61 : vector<1x16xf32> to vector<8x16xf32>
    %63 = arith.addf %59, %62 : vector<8x16xf32>
    %64 = arith.negf %63 : vector<8x16xf32>
    %65 = math.exp %64 : vector<8x16xf32>
    %cst_35 = arith.constant 1.000000e+00 : f32
    %66 = vector.broadcast %cst_35 : f32 to vector<8x16xf32>
    %67 = arith.addf %66, %65 : vector<8x16xf32>
    %68 = arith.divf %66, %67 : vector<8x16xf32>
    %69 = arith.mulf %63, %68 : vector<8x16xf32>
    %c0_36 = arith.constant 0 : index
    %c0_37 = arith.constant 0 : index
    %c0_38 = arith.constant 0 : index
    %70 = vector.load %arg11[%c0_36, %c0_37, %c0_38] : memref<1x1x16xf32, #tpu.memory_space<vmem>>, vector<1x1x16xf32>
    %71 = vector.shape_cast %70 : vector<1x1x16xf32> to vector<1x16xf32>
    %72 = vector.broadcast %71 : vector<1x16xf32> to vector<8x16xf32>
    %73 = arith.mulf %69, %72 : vector<8x16xf32>
    %c0_39 = arith.constant 0 : index
    %c0_40 = arith.constant 0 : index
    %c0_41 = arith.constant 0 : index
    %74 = vector.load %arg12[%c0_39, %c0_40, %c0_41] : memref<1x1x16xf32, #tpu.memory_space<vmem>>, vector<1x1x16xf32>
    %75 = vector.shape_cast %74 : vector<1x1x16xf32> to vector<1x16xf32>
    %76 = vector.broadcast %75 : vector<1x16xf32> to vector<8x16xf32>
    %77 = arith.addf %73, %76 : vector<8x16xf32>
    %c0_42 = arith.constant 0 : index
    %c0_43 = arith.constant 0 : index
    %c0_44 = arith.constant 0 : index
    %78 = vector.load %arg13[%c0_42, %c0_43, %c0_44] : memref<1x1x16xf32, #tpu.memory_space<vmem>>, vector<1x1x16xf32>
    %79 = vector.shape_cast %78 : vector<1x1x16xf32> to vector<1x16xf32>
    %80 = vector.broadcast %79 : vector<1x16xf32> to vector<8x16xf32>
    %81 = arith.mulf %69, %80 : vector<8x16xf32>
    %c0_45 = arith.constant 0 : index
    %c0_46 = arith.constant 0 : index
    %c0_47 = arith.constant 0 : index
    %82 = vector.load %arg14[%c0_45, %c0_46, %c0_47] : memref<1x1x16xf32, #tpu.memory_space<vmem>>, vector<1x1x16xf32>
    %83 = vector.shape_cast %82 : vector<1x1x16xf32> to vector<1x16xf32>
    %84 = vector.broadcast %83 : vector<1x16xf32> to vector<8x16xf32>
    %85 = arith.addf %81, %84 : vector<8x16xf32>
    %86 = arith.truncf %77 : vector<8x16xf32> to vector<8x16xbf16>
    %87 = arith.truncf %85 : vector<8x16xf32> to vector<8x16xbf16>
    %cst_48 = arith.constant dense<0.000000e+00> : vector<8x8xf32>
    %88 = tpu.matmul %86, %87, %cst_48 {dimension_numbers = #tpu.dot_dimension_numbers<[1], [1], [0], [0], [0, 0, 1, 0], [], []>} : vector<8x16xbf16>, vector<8x16xbf16>, vector<8x8xf32> -> vector<8x8xf32>
    %cst_49 = arith.constant 0.000000e+00 : f32
    %89 = vector.broadcast %cst_49 : f32 to vector<8x8xf32>
    %90 = arith.maximumf %88, %89 : vector<8x8xf32>
    %91 = arith.mulf %90, %90 : vector<8x8xf32>
    %92 = arith.truncf %91 : vector<8x8xf32> to vector<8x8xbf16>
    %93 = arith.truncf %43 : vector<8x64xf32> to vector<8x64xbf16>
    %cst_50 = arith.constant dense<0.000000e+00> : vector<8x64xf32>
    %94 = tpu.matmul %92, %93, %cst_50 {dimension_numbers = #tpu.dot_dimension_numbers<[1], [0], [0], [1], [0, 0, 1, 1], [], []>} : vector<8x8xbf16>, vector<8x64xbf16>, vector<8x64xf32> -> vector<8x64xf32>
    %95 = arith.mulf %94, %56 : vector<8x64xf32>
    %96 = arith.truncf %95 : vector<8x64xf32> to vector<8x64xbf16>
    %c0_51 = arith.constant 0 : index
    %c0_52 = arith.constant 0 : index
    %c0_53 = arith.constant 0 : index
    %97 = vector.load %arg15[%c0_51, %c0_52, %c0_53] : memref<1x64x32xbf16, #tpu.memory_space<vmem>>, vector<1x64x32xbf16>
    %98 = vector.shape_cast %97 : vector<1x64x32xbf16> to vector<64x32xbf16>
    %cst_54 = arith.constant dense<0.000000e+00> : vector<8x32xf32>
    %99 = tpu.matmul %96, %98, %cst_54 {dimension_numbers = #tpu.dot_dimension_numbers<[1], [0], [0], [1], [0, 0, 1, 1], [], []>} : vector<8x64xbf16>, vector<64x32xbf16>, vector<8x32xf32> -> vector<8x32xf32>
    %c0_55 = arith.constant 0 : index
    %c0_56 = arith.constant 0 : index
    %c0_57 = arith.constant 0 : index
    %100 = vector.load %arg16[%c0_55, %c0_56, %c0_57] : memref<1x1x32xf32, #tpu.memory_space<vmem>>, vector<1x1x32xf32>
    %101 = vector.shape_cast %100 : vector<1x1x32xf32> to vector<1x32xf32>
    %102 = vector.broadcast %101 : vector<1x32xf32> to vector<8x32xf32>
    %103 = arith.addf %99, %102 : vector<8x32xf32>
    %104 = arith.addf %103, %3 : vector<8x32xf32>
    %c1_i32 = arith.constant 1 : i32
    %105 = arith.cmpi sge, %arg1, %c1_i32 : i32
    %c2_i32 = arith.constant 2 : i32
    %c0_i32_58 = arith.constant 0 : i32
    %106 = arith.cmpi eq, %c2_i32, %c0_i32_58 : i32
    %c1_i32_59 = arith.constant 1 : i32
    %107 = arith.select %106, %c1_i32_59, %c2_i32 : i32
    %108 = arith.remsi %arg1, %107 : i32
    %c0_i32_60 = arith.constant 0 : i32
    %109 = arith.cmpi ne, %108, %c0_i32_60 : i32
    %c0_i32_61 = arith.constant 0 : i32
    %110 = arith.cmpi slt, %108, %c0_i32_61 : i32
    %c0_i32_62 = arith.constant 0 : i32
    %111 = arith.cmpi slt, %107, %c0_i32_62 : i32
    %112 = arith.xori %110, %111 : i1
    %113 = arith.andi %112, %109 : i1
    %114 = arith.addi %108, %107 : i32
    %115 = arith.select %113, %114, %108 : i32
    %c0_i32_63 = arith.constant 0 : i32
    %116 = arith.cmpi eq, %115, %c0_i32_63 : i32
    %117 = arith.andi %105, %116 : i1
    %c1_i32_64 = arith.constant 1 : i32
    %118 = arith.cmpi ne, %arg1, %c1_i32_64 : i32
    %119 = arith.andi %117, %118 : i1
    %120 = arith.extui %119 : i1 to i32
    %c0_i32_65 = arith.constant 0 : i32
    %121 = arith.cmpi ne, %120, %c0_i32_65 : i32
    scf.if %121 {
      %c0_71 = arith.constant 0 : index
      %c0_72 = arith.constant 0 : index
      %131 = vector.load %arg19[%c0_71, %c0_72] : memref<8x32xf32, #tpu.memory_space<vmem>>, vector<8x32xf32>
      %132 = arith.addf %104, %131 : vector<8x32xf32>
      %c0_73 = arith.constant 0 : index
      %c0_74 = arith.constant 0 : index
      %133 = vector.load %arg18[%c0_73, %c0_74] : memref<8x32xf32, #tpu.memory_space<vmem>>, vector<8x32xf32>
      tpu.vector_store %arg18[%c0_73, %c0_74], %132 {strides = array<i32>} : memref<8x32xf32, #tpu.memory_space<vmem>>, vector<8x32xf32>,
      %c0_75 = arith.constant 0 : index
      %c0_76 = arith.constant 0 : index
      %134 = vector.load %arg19[%c0_75, %c0_76] : memref<8x32xf32, #tpu.memory_space<vmem>>, vector<8x32xf32>
      tpu.vector_store %arg19[%c0_75, %c0_76], %132 {strides = array<i32>} : memref<8x32xf32, #tpu.memory_space<vmem>>, vector<8x32xf32>,
    } else {
    }
    %true = arith.constant true
    %122 = arith.xori %119, %true : i1
    %123 = arith.extui %122 : i1 to i32
    %c0_i32_66 = arith.constant 0 : i32
    %124 = arith.cmpi ne, %123, %c0_i32_66 : i32
    scf.if %124 {
      %c0_71 = arith.constant 0 : index
      %c0_72 = arith.constant 0 : index
      %131 = vector.load %arg18[%c0_71, %c0_72] : memref<8x32xf32, #tpu.memory_space<vmem>>, vector<8x32xf32>
      tpu.vector_store %arg18[%c0_71, %c0_72], %104 {strides = array<i32>} : memref<8x32xf32, #tpu.memory_space<vmem>>, vector<8x32xf32>,
    } else {
    }
    %c0_i32_67 = arith.constant 0 : i32
    %125 = arith.cmpi eq, %arg1, %c0_i32_67 : i32
    %126 = arith.extui %125 : i1 to i32
    %c0_i32_68 = arith.constant 0 : i32
    %127 = arith.cmpi ne, %126, %c0_i32_68 : i32
    scf.if %127 {
      %c0_71 = arith.constant 0 : index
      %c0_72 = arith.constant 0 : index
      %131 = vector.load %arg19[%c0_71, %c0_72] : memref<8x32xf32, #tpu.memory_space<vmem>>, vector<8x32xf32>
      tpu.vector_store %arg19[%c0_71, %c0_72], %104 {strides = array<i32>} : memref<8x32xf32, #tpu.memory_space<vmem>>, vector<8x32xf32>,
    } else {
    }
    %c1_i32_69 = arith.constant 1 : i32
    %128 = arith.cmpi eq, %arg1, %c1_i32_69 : i32
    %129 = arith.extui %128 : i1 to i32
    %c0_i32_70 = arith.constant 0 : i32
    %130 = arith.cmpi ne, %129, %c0_i32_70 : i32
    scf.if %130 {
      %c0_71 = arith.constant 0 : index
      %c0_72 = arith.constant 0 : index
      %131 = vector.load %arg18[%c0_71, %c0_72] : memref<8x32xf32, #tpu.memory_space<vmem>>, vector<8x32xf32>
      %c0_73 = arith.constant 0 : index
      %c0_74 = arith.constant 0 : index
      %c0_75 = arith.constant 0 : index
      %132 = vector.load %arg17[%c0_73, %c0_74, %c0_75] : memref<1x8x32xf32, #tpu.memory_space<vmem>>, vector<1x8x32xf32>
      %133 = vector.shape_cast %132 : vector<1x8x32xf32> to vector<8x32xf32>
      %134 = vector.shape_cast %131 : vector<8x32xf32> to vector<1x8x32xf32>
      tpu.vector_store %arg17[%c0_73, %c0_74, %c0_75], %134 {strides = array<i32>} : memref<1x8x32xf32, #tpu.memory_space<vmem>>, vector<1x8x32xf32>,
    } else {
    }
    return
  }
  func.func @transform_0(%arg0: i32, %arg1: i32) -> (i32, i32, i32) {
    %c0_i32 = arith.constant 0 : i32
    %c0_i32_0 = arith.constant 0 : i32
    %c0_i32_1 = arith.constant 0 : i32
    return %arg0, %c0_i32, %c0_i32_0 : i32, i32, i32
  }
  func.func @transform_1(%arg0: i32, %arg1: i32) -> (i32, i32, i32) {
    %c0_i32 = arith.constant 0 : i32
    %c0_i32_0 = arith.constant 0 : i32
    %c0_i32_1 = arith.constant 0 : i32
    return %arg1, %c0_i32, %c0_i32_0 : i32, i32, i32
  }
  func.func @transform_2(%arg0: i32, %arg1: i32) -> (i32, i32, i32) {
    %c0_i32 = arith.constant 0 : i32
    %c0_i32_0 = arith.constant 0 : i32
    %c0_i32_1 = arith.constant 0 : i32
    return %arg1, %c0_i32, %c0_i32_0 : i32, i32, i32
  }
  func.func @transform_3(%arg0: i32, %arg1: i32) -> (i32, i32, i32) {
    %c0_i32 = arith.constant 0 : i32
    %c0_i32_0 = arith.constant 0 : i32
    %c0_i32_1 = arith.constant 0 : i32
    return %arg1, %c0_i32, %c0_i32_0 : i32, i32, i32
  }
  func.func @transform_4(%arg0: i32, %arg1: i32) -> (i32, i32, i32) {
    %c0_i32 = arith.constant 0 : i32
    %c0_i32_0 = arith.constant 0 : i32
    %c0_i32_1 = arith.constant 0 : i32
    return %arg1, %c0_i32, %c0_i32_0 : i32, i32, i32
  }
  func.func @transform_5(%arg0: i32, %arg1: i32) -> (i32, i32, i32) {
    %c0_i32 = arith.constant 0 : i32
    %c0_i32_0 = arith.constant 0 : i32
    %c0_i32_1 = arith.constant 0 : i32
    return %arg1, %c0_i32, %c0_i32_0 : i32, i32, i32
  }
  func.func @transform_6(%arg0: i32, %arg1: i32) -> (i32, i32, i32) {
    %c0_i32 = arith.constant 0 : i32
    %c0_i32_0 = arith.constant 0 : i32
    %c0_i32_1 = arith.constant 0 : i32
    return %arg1, %c0_i32, %c0_i32_0 : i32, i32, i32
  }
  func.func @transform_7(%arg0: i32, %arg1: i32) -> (i32, i32, i32) {
    %c0_i32 = arith.constant 0 : i32
    %c0_i32_0 = arith.constant 0 : i32
    %c0_i32_1 = arith.constant 0 : i32
    return %arg1, %c0_i32, %c0_i32_0 : i32, i32, i32
  }
  func.func @transform_8(%arg0: i32, %arg1: i32) -> (i32, i32, i32) {
    %c0_i32 = arith.constant 0 : i32
    %c0_i32_0 = arith.constant 0 : i32
    %c0_i32_1 = arith.constant 0 : i32
    return %arg1, %c0_i32, %c0_i32_0 : i32, i32, i32
  }
  func.func @transform_9(%arg0: i32, %arg1: i32) -> (i32, i32, i32) {
    %c0_i32 = arith.constant 0 : i32
    %c0_i32_0 = arith.constant 0 : i32
    %c0_i32_1 = arith.constant 0 : i32
    return %arg1, %c0_i32, %c0_i32_0 : i32, i32, i32
  }
  func.func @transform_10(%arg0: i32, %arg1: i32) -> (i32, i32, i32) {
    %c0_i32 = arith.constant 0 : i32
    %c0_i32_0 = arith.constant 0 : i32
    %c0_i32_1 = arith.constant 0 : i32
    return %arg1, %c0_i32, %c0_i32_0 : i32, i32, i32
  }
  func.func @transform_11(%arg0: i32, %arg1: i32) -> (i32, i32, i32) {
    %c0_i32 = arith.constant 0 : i32
    %c0_i32_0 = arith.constant 0 : i32
    %c0_i32_1 = arith.constant 0 : i32
    return %arg1, %c0_i32, %c0_i32_0 : i32, i32, i32
  }
  func.func @transform_12(%arg0: i32, %arg1: i32) -> (i32, i32, i32) {
    %c0_i32 = arith.constant 0 : i32
    %c0_i32_0 = arith.constant 0 : i32
    %c0_i32_1 = arith.constant 0 : i32
    return %arg1, %c0_i32, %c0_i32_0 : i32, i32, i32
  }
  func.func @transform_13(%arg0: i32, %arg1: i32) -> (i32, i32, i32) {
    %c0_i32 = arith.constant 0 : i32
    %c0_i32_0 = arith.constant 0 : i32
    %c0_i32_1 = arith.constant 0 : i32
    return %arg1, %c0_i32, %c0_i32_0 : i32, i32, i32
  }
  func.func @transform_14(%arg0: i32, %arg1: i32) -> (i32, i32, i32) {
    %c0_i32 = arith.constant 0 : i32
    %c0_i32_0 = arith.constant 0 : i32
    %c0_i32_1 = arith.constant 0 : i32
    return %arg1, %c0_i32, %c0_i32_0 : i32, i32, i32
  }
  func.func @transform_15(%arg0: i32, %arg1: i32) -> (i32, i32, i32) {
    %c0_i32 = arith.constant 0 : i32
    %c0_i32_0 = arith.constant 0 : i32
    %c0_i32_1 = arith.constant 0 : i32
    return %arg0, %c0_i32, %c0_i32_0 : i32, i32, i32
  }
}

</mosaic_0001>

<llo_original>
// kernel: tpu_custom_call.1
$region0: #{tpu_custom_call.1}
  #allocation0 [shape = 'u32[]', space=smem, size = 0x4, offset = 0x4, fixed_abs, tag = 'smem constant byte address 0x4 - core index']
  #allocation1 [shape = 'u32[144,128]{1,0:T(1,128)}', space=vmem, size = 0x12000, scoped, tag = 'internal scratch']
  #allocation2 [shape = 'f32[8,32]{1,0:T(8,128)}', space=vmem, size = 0x1000, scoped, tag = 'scratch operand']
  #allocation3 [shape = 'f32[8,32]{1,0:T(8,128)}', space=vmem, size = 0x1000, scoped, tag = 'scratch operand']
  %s0 = inlined_call_operand.vmem [shape: f32[2,8,32], index: 0, kind: input, shape index: {}]
  %s1 = inlined_call_operand.vmem [shape: f32[2,1,32], index: 1, kind: input, shape index: {}]
  %s2 = inlined_call_operand.vmem [shape: f32[2,1,32], index: 2, kind: input, shape index: {}]
  %s3 = inlined_call_operand.vmem [shape: bf16[2,32,64], index: 3, kind: input, shape index: {}]
  %s4 = inlined_call_operand.vmem [shape: f32[2,1,64], index: 4, kind: input, shape index: {}]
  %s5 = inlined_call_operand.vmem [shape: bf16[2,32,64], index: 5, kind: input, shape index: {}]
  %s6 = inlined_call_operand.vmem [shape: f32[2,1,64], index: 6, kind: input, shape index: {}]
  %s7 = inlined_call_operand.vmem [shape: bf16[2,32,16], index: 7, kind: input, shape index: {}]
  %s8 = inlined_call_operand.vmem [shape: f32[2,1,16], index: 8, kind: input, shape index: {}]
  %s9 = inlined_call_operand.vmem [shape: f32[2,1,16], index: 9, kind: input, shape index: {}]
  %s10 = inlined_call_operand.vmem [shape: f32[2,1,16], index: 10, kind: input, shape index: {}]
  %s11 = inlined_call_operand.vmem [shape: f32[2,1,16], index: 11, kind: input, shape index: {}]
  %s12 = inlined_call_operand.vmem [shape: f32[2,1,16], index: 12, kind: input, shape index: {}]
  %s13 = inlined_call_operand.vmem [shape: bf16[2,64,32], index: 13, kind: input, shape index: {}]
  %s14 = inlined_call_operand.vmem [shape: f32[2,1,32], index: 14, kind: input, shape index: {}]
  %s15 = inlined_call_operand.hbm [shape: f32[2,8,32], index: 15, kind: output, shape index: {}]
  %s16 = sld [smem:[#allocation0]]
  $region113: #{tpu_custom_call.1} parent=0
    _
  %s18 = ssub.s32 1, %s16
  %s19 = scalar_select 0, %s18, %s16
  $region1: #{tpu_custom_call.1} parent=0
    #allocation4 [shape = 'u8[8192]{0}', space=vmem, size = 0x2000, scoped, tag = 'output window, operand 0']
    #allocation5 [shape = 's32[2]{0}', space=sflag, size = 0x8, scoped, tag = 'scoped memory for tpu_custom_call.1']
    %20 = vsyncpa [#allocation5], 0
    %s21 = scalar_lea.sflag [#allocation5], 1
    %22 = vsyncpa %s21, 0
    loop: start=0, step=1, limit=6
    $region2: #{tpu_custom_call.1} parent=1 // loop_pre_header
      _
    $region3: #{tpu_custom_call.1} parent=1 // loop_header
      %s24 = sphi 0, %s28
      %p25 = scmp.ge.s32.totalorder %s24, 6
      %s31 = sphi 0, %s43
      %s32 = sphi 0, %s39
      %s33 = sphi 0, %s31
      %s34 = sphi 0, %s32
      %s35 = sphi 0, %s33
      %s36 = sphi 0, %s34
      %s46 = sphi 0, %s48
      %s49 = sphi 0, %s46
      %s50 = sphi 0, %s49
      %s66 = sphi 0, %s50
      %s72 = sphi 0, %s74
      %s75 = sphi 0, %s72
      %s76 = sphi 0, %s75
      %s92 = sphi 0, %s76
      %s98 = sphi 0, %s100
      %s101 = sphi 0, %s98
      %s102 = sphi 0, %s101
      %s118 = sphi 0, %s102
      %s124 = sphi 0, %s126
      %s127 = sphi 0, %s124
      %s128 = sphi 0, %s127
      %s144 = sphi 0, %s128
      %s150 = sphi 0, %s152
      %s153 = sphi 0, %s150
      %s154 = sphi 0, %s153
      %s170 = sphi 0, %s154
      %s176 = sphi 0, %s178
      %s179 = sphi 0, %s176
      %s180 = sphi 0, %s179
      %s196 = sphi 0, %s180
      %s202 = sphi 0, %s204
      %s205 = sphi 0, %s202
      %s206 = sphi 0, %s205
      %s222 = sphi 0, %s206
      %s228 = sphi 0, %s230
      %s231 = sphi 0, %s228
      %s232 = sphi 0, %s231
      %s248 = sphi 0, %s232
      %s254 = sphi 0, %s256
      %s257 = sphi 0, %s254
      %s258 = sphi 0, %s257
      %s274 = sphi 0, %s258
      %s280 = sphi 0, %s282
      %s283 = sphi 0, %s280
      %s284 = sphi 0, %s283
      %s300 = sphi 0, %s284
      %s306 = sphi 0, %s308
      %s309 = sphi 0, %s306
      %s310 = sphi 0, %s309
      %s326 = sphi 0, %s310
      %s332 = sphi 0, %s334
      %s335 = sphi 0, %s332
      %s336 = sphi 0, %s335
      %s352 = sphi 0, %s336
      %s358 = sphi 0, %s360
      %s361 = sphi 0, %s358
      %s362 = sphi 0, %s361
      %s378 = sphi 0, %s362
      %s384 = sphi 0, %s386
      %s387 = sphi 0, %s384
      %s388 = sphi 0, %s387
      %s404 = sphi 0, %s388
      %s410 = sphi 0, %s412
      %s413 = sphi 0, %s410
      %s414 = sphi 0, %s413
      %s430 = sphi 0, %s414
      %s436 = sphi 0, %s438
      %s439 = sphi 0, %s436
      %s440 = sphi 0, %s439
      %s456 = sphi 0, %s440
    $region4: #{tpu_custom_call.1} parent=1 // loop_header_branch
      %27 = sbr.rel (%p25) target = $region8
    $region5: #{tpu_custom_call.1} parent=1 // loop_body
      %s29 = ssub.s32 %s24, 1
      %s30 = ssub.s32 %s24, 2
      %s37 = sadd.s32 1, %s32
      %p38 = scmp.ge.s32.totalorder %s37, 2
      %s39 = scalar_select %p38, 0, %s37
      %s40 = sadd.s32 1, %s31
      %s41 = scalar_select %p38, %s40, %s31
      %p42 = scmp.ge.s32.totalorder %s41, 2
      %s43 = scalar_select %p42, 0, %s41
      %s44 = ssub.s32 %s31, %s43
      %p45 = scmp.eq.s32.totalorder %s44, 0
      %s47 = sadd.s32 %s46, 1
      %s48 = scalar_select %p45, %s46, %s47
      %p51 = pneg %p45
      %p52 = scmp.eq.s32.totalorder %s24, 3
      %p53 = por %p51, %p52
      %p54 = scmp.ne.s32.totalorder %s46, %s49
      %p55 = scmp.eq.s32.totalorder %s24, 0
      %p56 = por %p54, %p55
      %p57 = scmp.ne.s32.totalorder %s46, %s49
      %p58 = scmp.eq.s32.totalorder %s29, 3
      %p59 = por %p57, %p58
      %p60 = scmp.ne.s32.totalorder %s49, %s50
      %p61 = scmp.eq.s32.totalorder %s29, 0
      %p62 = por %p60, %p61
      %p63 = scmp.ne.s32.totalorder %s49, %s50
      %p64 = scmp.eq.s32.totalorder %s30, 3
      %p65 = por %p63, %p64
      %p67 = scmp.ne.s32.totalorder %s50, %s66
      %p68 = scmp.eq.s32.totalorder %s30, 0
      %p69 = por %p67, %p68
      %s70 = ssub.s32 %s32, %s39
      %p71 = scmp.eq.s32.totalorder %s70, 0
      %s73 = sadd.s32 %s72, 1
      %s74 = scalar_select %p71, %s72, %s73
      %p77 = pneg %p71
      %p78 = scmp.eq.s32.totalorder %s24, 3
      %p79 = por %p77, %p78
      %p80 = scmp.ne.s32.totalorder %s72, %s75
      %p81 = scmp.eq.s32.totalorder %s24, 0
      %p82 = por %p80, %p81
      %p83 = scmp.ne.s32.totalorder %s72, %s75
      %p84 = scmp.eq.s32.totalorder %s29, 3
      %p85 = por %p83, %p84
      %p86 = scmp.ne.s32.totalorder %s75, %s76
      %p87 = scmp.eq.s32.totalorder %s29, 0
      %p88 = por %p86, %p87
      %p89 = scmp.ne.s32.totalorder %s75, %s76
      %p90 = scmp.eq.s32.totalorder %s30, 3
      %p91 = por %p89, %p90
      %p93 = scmp.ne.s32.totalorder %s76, %s92
      %p94 = scmp.eq.s32.totalorder %s30, 0
      %p95 = por %p93, %p94
      %s96 = ssub.s32 %s32, %s39
      %p97 = scmp.eq.s32.totalorder %s96, 0
      %s99 = sadd.s32 %s98, 1
      %s100 = scalar_select %p97, %s98, %s99
      %p103 = pneg %p97
      %p104 = scmp.eq.s32.totalorder %s24, 3
      %p105 = por %p103, %p104
      %p106 = scmp.ne.s32.totalorder %s98, %s101
      %p107 = scmp.eq.s32.totalorder %s24, 0
      %p108 = por %p106, %p107
      %p109 = scmp.ne.s32.totalorder %s98, %s101
      %p110 = scmp.eq.s32.totalorder %s29, 3
      %p111 = por %p109, %p110
      %p112 = scmp.ne.s32.totalorder %s101, %s102
      %p113 = scmp.eq.s32.totalorder %s29, 0
      %p114 = por %p112, %p113
      %p115 = scmp.ne.s32.totalorder %s101, %s102
      %p116 = scmp.eq.s32.totalorder %s30, 3
      %p117 = por %p115, %p116
      %p119 = scmp.ne.s32.totalorder %s102, %s118
      %p120 = scmp.eq.s32.totalorder %s30, 0
      %p121 = por %p119, %p120
      %s122 = ssub.s32 %s32, %s39
      %p123 = scmp.eq.s32.totalorder %s122, 0
      %s125 = sadd.s32 %s124, 1
      %s126 = scalar_select %p123, %s124, %s125
      %p129 = pneg %p123
      %p130 = scmp.eq.s32.totalorder %s24, 3
      %p131 = por %p129, %p130
      %p132 = scmp.ne.s32.totalorder %s124, %s127
      %p133 = scmp.eq.s32.totalorder %s24, 0
      %p134 = por %p132, %p133
      %p135 = scmp.ne.s32.totalorder %s124, %s127
      %p136 = scmp.eq.s32.totalorder %s29, 3
      %p137 = por %p135, %p136
      %p138 = scmp.ne.s32.totalorder %s127, %s128
      %p139 = scmp.eq.s32.totalorder %s29, 0
      %p140 = por %p138, %p139
      %p141 = scmp.ne.s32.totalorder %s127, %s128
      %p142 = scmp.eq.s32.totalorder %s30, 3
      %p143 = por %p141, %p142
      %p145 = scmp.ne.s32.totalorder %s128, %s144
      %p146 = scmp.eq.s32.totalorder %s30, 0
      %p147 = por %p145, %p146
      %s148 = ssub.s32 %s32, %s39
      %p149 = scmp.eq.s32.totalorder %s148, 0
      %s151 = sadd.s32 %s150, 1
      %s152 = scalar_select %p149, %s150, %s151
      %p155 = pneg %p149
      %p156 = scmp.eq.s32.totalorder %s24, 3
      %p157 = por %p155, %p156
      %p158 = scmp.ne.s32.totalorder %s150, %s153
      %p159 = scmp.eq.s32.totalorder %s24, 0
      %p160 = por %p158, %p159
      %p161 = scmp.ne.s32.totalorder %s150, %s153
      %p162 = scmp.eq.s32.totalorder %s29, 3
      %p163 = por %p161, %p162
      %p164 = scmp.ne.s32.totalorder %s153, %s154
      %p165 = scmp.eq.s32.totalorder %s29, 0
      %p166 = por %p164, %p165
      %p167 = scmp.ne.s32.totalorder %s153, %s154
      %p168 = scmp.eq.s32.totalorder %s30, 3
      %p169 = por %p167, %p168
      %p171 = scmp.ne.s32.totalorder %s154, %s170
      %p172 = scmp.eq.s32.totalorder %s30, 0
      %p173 = por %p171, %p172
      %s174 = ssub.s32 %s32, %s39
      %p175 = scmp.eq.s32.totalorder %s174, 0
      %s177 = sadd.s32 %s176, 1
      %s178 = scalar_select %p175, %s176, %s177
      %p181 = pneg %p175
      %p182 = scmp.eq.s32.totalorder %s24, 3
      %p183 = por %p181, %p182
      %p184 = scmp.ne.s32.totalorder %s176, %s179
      %p185 = scmp.eq.s32.totalorder %s24, 0
      %p186 = por %p184, %p185
      %p187 = scmp.ne.s32.totalorder %s176, %s179
      %p188 = scmp.eq.s32.totalorder %s29, 3
      %p189 = por %p187, %p188
      %p190 = scmp.ne.s32.totalorder %s179, %s180
      %p191 = scmp.eq.s32.totalorder %s29, 0
      %p192 = por %p190, %p191
      %p193 = scmp.ne.s32.totalorder %s179, %s180
      %p194 = scmp.eq.s32.totalorder %s30, 3
      %p195 = por %p193, %p194
      %p197 = scmp.ne.s32.totalorder %s180, %s196
      %p198 = scmp.eq.s32.totalorder %s30, 0
      %p199 = por %p197, %p198
      %s200 = ssub.s32 %s32, %s39
      %p201 = scmp.eq.s32.totalorder %s200, 0
      %s203 = sadd.s32 %s202, 1
      %s204 = scalar_select %p201, %s202, %s203
      %p207 = pneg %p201
      %p208 = scmp.eq.s32.totalorder %s24, 3
      %p209 = por %p207, %p208
      %p210 = scmp.ne.s32.totalorder %s202, %s205
      %p211 = scmp.eq.s32.totalorder %s24, 0
      %p212 = por %p210, %p211
      %p213 = scmp.ne.s32.totalorder %s202, %s205
      %p214 = scmp.eq.s32.totalorder %s29, 3
      %p215 = por %p213, %p214
      %p216 = scmp.ne.s32.totalorder %s205, %s206
      %p217 = scmp.eq.s32.totalorder %s29, 0
      %p218 = por %p216, %p217
      %p219 = scmp.ne.s32.totalorder %s205, %s206
      %p220 = scmp.eq.s32.totalorder %s30, 3
      %p221 = por %p219, %p220
      %p223 = scmp.ne.s32.totalorder %s206, %s222
      %p224 = scmp.eq.s32.totalorder %s30, 0
      %p225 = por %p223, %p224
      %s226 = ssub.s32 %s32, %s39
      %p227 = scmp.eq.s32.totalorder %s226, 0
      %s229 = sadd.s32 %s228, 1
      %s230 = scalar_select %p227, %s228, %s229
      %p233 = pneg %p227
      %p234 = scmp.eq.s32.totalorder %s24, 3
      %p235 = por %p233, %p234
      %p236 = scmp.ne.s32.totalorder %s228, %s231
      %p237 = scmp.eq.s32.totalorder %s24, 0
      %p238 = por %p236, %p237
      %p239 = scmp.ne.s32.totalorder %s228, %s231
      %p240 = scmp.eq.s32.totalorder %s29, 3
      %p241 = por %p239, %p240
      %p242 = scmp.ne.s32.totalorder %s231, %s232
      %p243 = scmp.eq.s32.totalorder %s29, 0
      %p244 = por %p242, %p243
      %p245 = scmp.ne.s32.totalorder %s231, %s232
      %p246 = scmp.eq.s32.totalorder %s30, 3
      %p247 = por %p245, %p246
      %p249 = scmp.ne.s32.totalorder %s232, %s248
      %p250 = scmp.eq.s32.totalorder %s30, 0
      %p251 = por %p249, %p250
      %s252 = ssub.s32 %s32, %s39
      %p253 = scmp.eq.s32.totalorder %s252, 0
      %s255 = sadd.s32 %s254, 1
      %s256 = scalar_select %p253, %s254, %s255
      %p259 = pneg %p253
      %p260 = scmp.eq.s32.totalorder %s24, 3
      %p261 = por %p259, %p260
      %p262 = scmp.ne.s32.totalorder %s254, %s257
      %p263 = scmp.eq.s32.totalorder %s24, 0
      %p264 = por %p262, %p263
      %p265 = scmp.ne.s32.totalorder %s254, %s257
      %p266 = scmp.eq.s32.totalorder %s29, 3
      %p267 = por %p265, %p266
      %p268 = scmp.ne.s32.totalorder %s257, %s258
      %p269 = scmp.eq.s32.totalorder %s29, 0
      %p270 = por %p268, %p269
      %p271 = scmp.ne.s32.totalorder %s257, %s258
      %p272 = scmp.eq.s32.totalorder %s30, 3
      %p273 = por %p271, %p272
      %p275 = scmp.ne.s32.totalorder %s258, %s274
      %p276 = scmp.eq.s32.totalorder %s30, 0
      %p277 = por %p275, %p276
      %s278 = ssub.s32 %s32, %s39
      %p279 = scmp.eq.s32.totalorder %s278, 0
      %s281 = sadd.s32 %s280, 1
      %s282 = scalar_select %p279, %s280, %s281
      %p285 = pneg %p279
      %p286 = scmp.eq.s32.totalorder %s24, 3
      %p287 = por %p285, %p286
      %p288 = scmp.ne.s32.totalorder %s280, %s283
      %p289 = scmp.eq.s32.totalorder %s24, 0
      %p290 = por %p288, %p289
      %p291 = scmp.ne.s32.totalorder %s280, %s283
      %p292 = scmp.eq.s32.totalorder %s29, 3
      %p293 = por %p291, %p292
      %p294 = scmp.ne.s32.totalorder %s283, %s284
      %p295 = scmp.eq.s32.totalorder %s29, 0
      %p296 = por %p294, %p295
      %p297 = scmp.ne.s32.totalorder %s283, %s284
      %p298 = scmp.eq.s32.totalorder %s30, 3
      %p299 = por %p297, %p298
      %p301 = scmp.ne.s32.totalorder %s284, %s300
      %p302 = scmp.eq.s32.totalorder %s30, 0
      %p303 = por %p301, %p302
      %s304 = ssub.s32 %s32, %s39
      %p305 = scmp.eq.s32.totalorder %s304, 0
      %s307 = sadd.s32 %s306, 1
      %s308 = scalar_select %p305, %s306, %s307
      %p311 = pneg %p305
      %p312 = scmp.eq.s32.totalorder %s24, 3
      %p313 = por %p311, %p312
      %p314 = scmp.ne.s32.totalorder %s306, %s309
      %p315 = scmp.eq.s32.totalorder %s24, 0
      %p316 = por %p314, %p315
      %p317 = scmp.ne.s32.totalorder %s306, %s309
      %p318 = scmp.eq.s32.totalorder %s29, 3
      %p319 = por %p317, %p318
      %p320 = scmp.ne.s32.totalorder %s309, %s310
      %p321 = scmp.eq.s32.totalorder %s29, 0
      %p322 = por %p320, %p321
      %p323 = scmp.ne.s32.totalorder %s309, %s310
      %p324 = scmp.eq.s32.totalorder %s30, 3
      %p325 = por %p323, %p324
      %p327 = scmp.ne.s32.totalorder %s310, %s326
      %p328 = scmp.eq.s32.totalorder %s30, 0
      %p329 = por %p327, %p328
      %s330 = ssub.s32 %s32, %s39
      %p331 = scmp.eq.s32.totalorder %s330, 0
      %s333 = sadd.s32 %s332, 1
      %s334 = scalar_select %p331, %s332, %s333
      %p337 = pneg %p331
      %p338 = scmp.eq.s32.totalorder %s24, 3
      %p339 = por %p337, %p338
      %p340 = scmp.ne.s32.totalorder %s332, %s335
      %p341 = scmp.eq.s32.totalorder %s24, 0
      %p342 = por %p340, %p341
      %p343 = scmp.ne.s32.totalorder %s332, %s335
      %p344 = scmp.eq.s32.totalorder %s29, 3
      %p345 = por %p343, %p344
      %p346 = scmp.ne.s32.totalorder %s335, %s336
      %p347 = scmp.eq.s32.totalorder %s29, 0
      %p348 = por %p346, %p347
      %p349 = scmp.ne.s32.totalorder %s335, %s336
      %p350 = scmp.eq.s32.totalorder %s30, 3
      %p351 = por %p349, %p350
      %p353 = scmp.ne.s32.totalorder %s336, %s352
      %p354 = scmp.eq.s32.totalorder %s30, 0
      %p355 = por %p353, %p354
      %s356 = ssub.s32 %s32, %s39
      %p357 = scmp.eq.s32.totalorder %s356, 0
      %s359 = sadd.s32 %s358, 1
      %s360 = scalar_select %p357, %s358, %s359
      %p363 = pneg %p357
      %p364 = scmp.eq.s32.totalorder %s24, 3
      %p365 = por %p363, %p364
      %p366 = scmp.ne.s32.totalorder %s358, %s361
      %p367 = scmp.eq.s32.totalorder %s24, 0
      %p368 = por %p366, %p367
      %p369 = scmp.ne.s32.totalorder %s358, %s361
      %p370 = scmp.eq.s32.totalorder %s29, 3
      %p371 = por %p369, %p370
      %p372 = scmp.ne.s32.totalorder %s361, %s362
      %p373 = scmp.eq.s32.totalorder %s29, 0
      %p374 = por %p372, %p373
      %p375 = scmp.ne.s32.totalorder %s361, %s362
      %p376 = scmp.eq.s32.totalorder %s30, 3
      %p377 = por %p375, %p376
      %p379 = scmp.ne.s32.totalorder %s362, %s378
      %p380 = scmp.eq.s32.totalorder %s30, 0
      %p381 = por %p379, %p380
      %s382 = ssub.s32 %s32, %s39
      %p383 = scmp.eq.s32.totalorder %s382, 0
      %s385 = sadd.s32 %s384, 1
      %s386 = scalar_select %p383, %s384, %s385
      %p389 = pneg %p383
      %p390 = scmp.eq.s32.totalorder %s24, 3
      %p391 = por %p389, %p390
      %p392 = scmp.ne.s32.totalorder %s384, %s387
      %p393 = scmp.eq.s32.totalorder %s24, 0
      %p394 = por %p392, %p393
      %p395 = scmp.ne.s32.totalorder %s384, %s387
      %p396 = scmp.eq.s32.totalorder %s29, 3
      %p397 = por %p395, %p396
      %p398 = scmp.ne.s32.totalorder %s387, %s388
      %p399 = scmp.eq.s32.totalorder %s29, 0
      %p400 = por %p398, %p399
      %p401 = scmp.ne.s32.totalorder %s387, %s388
      %p402 = scmp.eq.s32.totalorder %s30, 3
      %p403 = por %p401, %p402
      %p405 = scmp.ne.s32.totalorder %s388, %s404
      %p406 = scmp.eq.s32.totalorder %s30, 0
      %p407 = por %p405, %p406
      %s408 = ssub.s32 %s32, %s39
      %p409 = scmp.eq.s32.totalorder %s408, 0
      %s411 = sadd.s32 %s410, 1
      %s412 = scalar_select %p409, %s410, %s411
      %p415 = pneg %p409
      %p416 = scmp.eq.s32.totalorder %s24, 3
      %p417 = por %p415, %p416
      %p418 = scmp.ne.s32.totalorder %s410, %s413
      %p419 = scmp.eq.s32.totalorder %s24, 0
      %p420 = por %p418, %p419
      %p421 = scmp.ne.s32.totalorder %s410, %s413
      %p422 = scmp.eq.s32.totalorder %s29, 3
      %p423 = por %p421, %p422
      %p424 = scmp.ne.s32.totalorder %s413, %s414
      %p425 = scmp.eq.s32.totalorder %s29, 0
      %p426 = por %p424, %p425
      %p427 = scmp.ne.s32.totalorder %s413, %s414
      %p428 = scmp.eq.s32.totalorder %s30, 3
      %p429 = por %p427, %p428
      %p431 = scmp.ne.s32.totalorder %s414, %s430
      %p432 = scmp.eq.s32.totalorder %s30, 0
      %p433 = por %p431, %p432
      %s434 = ssub.s32 %s31, %s43
      %p435 = scmp.eq.s32.totalorder %s434, 0
      %s437 = sadd.s32 %s436, 1
      %s438 = scalar_select %p435, %s436, %s437
      %p441 = pneg %p435
      %p442 = scmp.eq.s32.totalorder %s24, 3
      %p443 = por %p441, %p442
      %p444 = scmp.ne.s32.totalorder %s436, %s439
      %p445 = scmp.eq.s32.totalorder %s24, 0
      %p446 = por %p444, %p445
      %p447 = scmp.ne.s32.totalorder %s436, %s439
      %p448 = scmp.eq.s32.totalorder %s29, 3
      %p449 = por %p447, %p448
      %p450 = scmp.ne.s32.totalorder %s439, %s440
      %p451 = scmp.eq.s32.totalorder %s29, 0
      %p452 = por %p450, %p451
      %p453 = scmp.ne.s32.totalorder %s439, %s440
      %p454 = scmp.eq.s32.totalorder %s30, 3
      %p455 = por %p453, %p454
      %p457 = scmp.ne.s32.totalorder %s440, %s456
      %p458 = scmp.eq.s32.totalorder %s30, 0
      %p459 = por %p457, %p458
      %p460 = scmp.le.s32.totalorder 1, %s24
      %p461 = scmp.lt.s32.totalorder %s24, 5
      %p462 = pnand %p460, %p461
      %p463 = pneg %p462
      // Predicated region
      $region9: #{tpu_custom_call.1} parent=5 // pred_check
        _
      $region10: #{tpu_custom_call.1} parent=5 // pred_check_branch
        %465 = sbr.rel (%p462) target = $region12
      $region11: #{tpu_custom_call.1} parent=5 // pred_region
        %s466 = ssub.s32 %s24, 1
      $region12: #{tpu_custom_call.1} parent=5 // pred_fallthru
        _
      %p467 = scmp.lt.s32.totalorder %s24, 4
      // Predicated region
      $region13: #{tpu_custom_call.1} parent=5 // pred_check
        %p468 = pneg %p467
      $region14: #{tpu_custom_call.1} parent=5 // pred_check_branch
        %470 = sbr.rel (%p468) target = $region16
      $region15: #{tpu_custom_call.1} parent=5 // pred_region
        // Predicated region
        $region17: #{tpu_custom_call.1} parent=15 // pred_check
          %p471 = pneg %p56
        $region18: #{tpu_custom_call.1} parent=15 // pred_check_branch
          %473 = sbr.rel (%p471) target = $region20
        $region19: #{tpu_custom_call.1} parent=15 // pred_region
          %p474 = scmp.lt.s32.totalorder %s31, 1
          %s475 = scalar_select %p474, %s31, 1
          %s476 = smul.addr %s475, 8
          %s477 = scalar_lea.vmem %s0, %s476
        $region20: #{tpu_custom_call.1} parent=15 // pred_fallthru
          _
        // Predicated region
        $region21: #{tpu_custom_call.1} parent=15 // pred_check
          %p478 = pneg %p82
        $region22: #{tpu_custom_call.1} parent=15 // pred_check_branch
          %480 = sbr.rel (%p478) target = $region24
        $region23: #{tpu_custom_call.1} parent=15 // pred_region
          %p481 = scmp.lt.s32.totalorder %s32, 1
          %s482 = scalar_select %p481, %s32, 1
          %s483 = scalar_lea.vmem %s1, %s482
        $region24: #{tpu_custom_call.1} parent=15 // pred_fallthru
          _
        // Predicated region
        $region25: #{tpu_custom_call.1} parent=15 // pred_check
          %p484 = pneg %p108
        $region26: #{tpu_custom_call.1} parent=15 // pred_check_branch
          %486 = sbr.rel (%p484) target = $region28
        $region27: #{tpu_custom_call.1} parent=15 // pred_region
          %p487 = scmp.lt.s32.totalorder %s32, 1
          %s488 = scalar_select %p487, %s32, 1
          %s489 = scalar_lea.vmem %s2, %s488
        $region28: #{tpu_custom_call.1} parent=15 // pred_fallthru
          _
        // Predicated region
        $region29: #{tpu_custom_call.1} parent=15 // pred_check
          %p490 = pneg %p134
        $region30: #{tpu_custom_call.1} parent=15 // pred_check_branch
          %492 = sbr.rel (%p490) target = $region32
        $region31: #{tpu_custom_call.1} parent=15 // pred_region
          %p493 = scmp.lt.s32.totalorder %s32, 1
          %s494 = scalar_select %p493, %s32, 1
          %s495 = smul.addr %s494, 4
          %s496 = smul.addr %s495, 4
          %s497 = scalar_lea.vmem %s3, %s496
        $region32: #{tpu_custom_call.1} parent=15 // pred_fallthru
          _
        // Predicated region
        $region33: #{tpu_custom_call.1} parent=15 // pred_check
          %p498 = pneg %p160
        $region34: #{tpu_custom_call.1} parent=15 // pred_check_branch
          %500 = sbr.rel (%p498) target = $region36
        $region35: #{tpu_custom_call.1} parent=15 // pred_region
          %p501 = scmp.lt.s32.totalorder %s32, 1
          %s502 = scalar_select %p501, %s32, 1
          %s503 = scalar_lea.vmem %s4, %s502
        $region36: #{tpu_custom_call.1} parent=15 // pred_fallthru
          _
        // Predicated region
        $region37: #{tpu_custom_call.1} parent=15 // pred_check
          %p504 = pneg %p186
        $region38: #{tpu_custom_call.1} parent=15 // pred_check_branch
          %506 = sbr.rel (%p504) target = $region40
        $region39: #{tpu_custom_call.1} parent=15 // pred_region
          %p507 = scmp.lt.s32.totalorder %s32, 1
          %s508 = scalar_select %p507, %s32, 1
          %s509 = smul.addr %s508, 4
          %s510 = smul.addr %s509, 4
          %s511 = scalar_lea.vmem %s5, %s510
        $region40: #{tpu_custom_call.1} parent=15 // pred_fallthru
          _
        // Predicated region
        $region41: #{tpu_custom_call.1} parent=15 // pred_check
          %p512 = pneg %p212
        $region42: #{tpu_custom_call.1} parent=15 // pred_check_branch
          %514 = sbr.rel (%p512) target = $region44
        $region43: #{tpu_custom_call.1} parent=15 // pred_region
          %p515 = scmp.lt.s32.totalorder %s32, 1
          %s516 = scalar_select %p515, %s32, 1
          %s517 = scalar_lea.vmem %s6, %s516
        $region44: #{tpu_custom_call.1} parent=15 // pred_fallthru
          _
        // Predicated region
        $region45: #{tpu_custom_call.1} parent=15 // pred_check
          %p518 = pneg %p238
        $region46: #{tpu_custom_call.1} parent=15 // pred_check_branch
          %520 = sbr.rel (%p518) target = $region48
        $region47: #{tpu_custom_call.1} parent=15 // pred_region
          %p521 = scmp.lt.s32.totalorder %s32, 1
          %s522 = scalar_select %p521, %s32, 1
          %s523 = smul.addr %s522, 4
          %s524 = smul.addr %s523, 4
          %s525 = scalar_lea.vmem %s7, %s524
        $region48: #{tpu_custom_call.1} parent=15 // pred_fallthru
          _
        // Predicated region
        $region49: #{tpu_custom_call.1} parent=15 // pred_check
          %p526 = pneg %p264
        $region50: #{tpu_custom_call.1} parent=15 // pred_check_branch
          %528 = sbr.rel (%p526) target = $region52
        $region51: #{tpu_custom_call.1} parent=15 // pred_region
          %p529 = scmp.lt.s32.totalorder %s32, 1
          %s530 = scalar_select %p529, %s32, 1
          %s531 = scalar_lea.vmem %s8, %s530
        $region52: #{tpu_custom_call.1} parent=15 // pred_fallthru
          _
        // Predicated region
        $region53: #{tpu_custom_call.1} parent=15 // pred_check
          %p532 = pneg %p290
        $region54: #{tpu_custom_call.1} parent=15 // pred_check_branch
          %534 = sbr.rel (%p532) target = $region56
        $region55: #{tpu_custom_call.1} parent=15 // pred_region
          %p535 = scmp.lt.s32.totalorder %s32, 1
          %s536 = scalar_select %p535, %s32, 1
          %s537 = scalar_lea.vmem %s9, %s536
        $region56: #{tpu_custom_call.1} parent=15 // pred_fallthru
          _
        // Predicated region
        $region57: #{tpu_custom_call.1} parent=15 // pred_check
          %p538 = pneg %p316
        $region58: #{tpu_custom_call.1} parent=15 // pred_check_branch
          %540 = sbr.rel (%p538) target = $region60
        $region59: #{tpu_custom_call.1} parent=15 // pred_region
          %p541 = scmp.lt.s32.totalorder %s32, 1
          %s542 = scalar_select %p541, %s32, 1
          %s543 = scalar_lea.vmem %s10, %s542
        $region60: #{tpu_custom_call.1} parent=15 // pred_fallthru
          _
        // Predicated region
        $region61: #{tpu_custom_call.1} parent=15 // pred_check
          %p544 = pneg %p342
        $region62: #{tpu_custom_call.1} parent=15 // pred_check_branch
          %546 = sbr.rel (%p544) target = $region64
        $region63: #{tpu_custom_call.1} parent=15 // pred_region
          %p547 = scmp.lt.s32.totalorder %s32, 1
          %s548 = scalar_select %p547, %s32, 1
          %s549 = scalar_lea.vmem %s11, %s548
        $region64: #{tpu_custom_call.1} parent=15 // pred_fallthru
          _
        // Predicated region
        $region65: #{tpu_custom_call.1} parent=15 // pred_check
          %p550 = pneg %p368
        $region66: #{tpu_custom_call.1} parent=15 // pred_check_branch
          %552 = sbr.rel (%p550) target = $region68
        $region67: #{tpu_custom_call.1} parent=15 // pred_region
          %p553 = scmp.lt.s32.totalorder %s32, 1
          %s554 = scalar_select %p553, %s32, 1
          %s555 = scalar_lea.vmem %s12, %s554
        $region68: #{tpu_custom_call.1} parent=15 // pred_fallthru
          _
        // Predicated region
        $region69: #{tpu_custom_call.1} parent=15 // pred_check
          %p556 = pneg %p394
        $region70: #{tpu_custom_call.1} parent=15 // pred_check_branch
          %558 = sbr.rel (%p556) target = $region72
        $region71: #{tpu_custom_call.1} parent=15 // pred_region
          %p559 = scmp.lt.s32.totalorder %s32, 1
          %s560 = scalar_select %p559, %s32, 1
          %s561 = smul.addr %s560, 8
          %s562 = smul.addr %s561, 4
          %s563 = scalar_lea.vmem %s13, %s562
        $region72: #{tpu_custom_call.1} parent=15 // pred_fallthru
          _
        // Predicated region
        $region73: #{tpu_custom_call.1} parent=15 // pred_check
          %p564 = pneg %p420
        $region74: #{tpu_custom_call.1} parent=15 // pred_check_branch
          %566 = sbr.rel (%p564) target = $region76
        $region75: #{tpu_custom_call.1} parent=15 // pred_region
          %p567 = scmp.lt.s32.totalorder %s32, 1
          %s568 = scalar_select %p567, %s32, 1
          %s569 = scalar_lea.vmem %s14, %s568
        $region76: #{tpu_custom_call.1} parent=15 // pred_fallthru
          _
      $region16: #{tpu_custom_call.1} parent=5 // pred_fallthru
        _
      %p570 = scmp.le.s32.totalorder 1, %s24
      %p571 = scmp.lt.s32.totalorder %s24, 5
      %p572 = pnand %p570, %p571
      %p573 = pneg %p572
      // Predicated region
      $region77: #{tpu_custom_call.1} parent=5 // pred_check
        _
      $region78: #{tpu_custom_call.1} parent=5 // pred_check_branch
        %575 = sbr.rel (%p572) target = $region80
      $region79: #{tpu_custom_call.1} parent=5 // pred_region
        %s576 = ssub.s32 %s24, 1
        %p577 = scmp.lt.s32.totalorder %s33, 1
        %s578 = scalar_select %p577, %s33, 1
        %s579 = smul.addr %s578, 8
        %s580 = scalar_lea.vmem %s0, %s579
        %p581 = pneg %p62
        %p582 = pneg %p59
        %p583 = scmp.lt.s32.totalorder %s34, 1
        %s584 = scalar_select %p583, %s34, 1
        %s585 = scalar_lea.vmem %s1, %s584
        %p586 = pneg %p88
        %p587 = pneg %p85
        %p588 = scmp.lt.s32.totalorder %s34, 1
        %s589 = scalar_select %p588, %s34, 1
        %s590 = scalar_lea.vmem %s2, %s589
        %p591 = pneg %p114
        %p592 = pneg %p111
        %p593 = scmp.lt.s32.totalorder %s34, 1
        %s594 = scalar_select %p593, %s34, 1
        %s595 = smul.addr %s594, 4
        %s596 = smul.addr %s595, 4
        %s597 = scalar_lea.vmem %s3, %s596
        %p598 = pneg %p140
        %p599 = pneg %p137
        %p600 = scmp.lt.s32.totalorder %s34, 1
        %s601 = scalar_select %p600, %s34, 1
        %s602 = scalar_lea.vmem %s4, %s601
        %p603 = pneg %p166
        %p604 = pneg %p163
        %p605 = scmp.lt.s32.totalorder %s34, 1
        %s606 = scalar_select %p605, %s34, 1
        %s607 = smul.addr %s606, 4
        %s608 = smul.addr %s607, 4
        %s609 = scalar_lea.vmem %s5, %s608
        %p610 = pneg %p192
        %p611 = pneg %p189
        %p612 = scmp.lt.s32.totalorder %s34, 1
        %s613 = scalar_select %p612, %s34, 1
        %s614 = scalar_lea.vmem %s6, %s613
        %p615 = pneg %p218
        %p616 = pneg %p215
        %p617 = scmp.lt.s32.totalorder %s34, 1
        %s618 = scalar_select %p617, %s34, 1
        %s619 = smul.addr %s618, 4
        %s620 = smul.addr %s619, 4
        %s621 = scalar_lea.vmem %s7, %s620
        %p622 = pneg %p244
        %p623 = pneg %p241
        %p624 = scmp.lt.s32.totalorder %s34, 1
        %s625 = scalar_select %p624, %s34, 1
        %s626 = scalar_lea.vmem %s8, %s625
        %p627 = pneg %p270
        %p628 = pneg %p267
        %p629 = scmp.lt.s32.totalorder %s34, 1
        %s630 = scalar_select %p629, %s34, 1
        %s631 = scalar_lea.vmem %s9, %s630
        %p632 = pneg %p296
        %p633 = pneg %p293
        %p634 = scmp.lt.s32.totalorder %s34, 1
        %s635 = scalar_select %p634, %s34, 1
        %s636 = scalar_lea.vmem %s10, %s635
        %p637 = pneg %p322
        %p638 = pneg %p319
        %p639 = scmp.lt.s32.totalorder %s34, 1
        %s640 = scalar_select %p639, %s34, 1
        %s641 = scalar_lea.vmem %s11, %s640
        %p642 = pneg %p348
        %p643 = pneg %p345
        %p644 = scmp.lt.s32.totalorder %s34, 1
        %s645 = scalar_select %p644, %s34, 1
        %s646 = scalar_lea.vmem %s12, %s645
        %p647 = pneg %p374
        %p648 = pneg %p371
        %p649 = scmp.lt.s32.totalorder %s34, 1
        %s650 = scalar_select %p649, %s34, 1
        %s651 = smul.addr %s650, 8
        %s652 = smul.addr %s651, 4
        %s653 = scalar_lea.vmem %s13, %s652
        %p654 = pneg %p400
        %p655 = pneg %p397
        %p656 = scmp.lt.s32.totalorder %s34, 1
        %s657 = scalar_select %p656, %s34, 1
        %s658 = scalar_lea.vmem %s14, %s657
        %p659 = pneg %p426
        %p660 = pneg %p423
        %p661 = pneg %p452
        %p662 = pneg %p449
        %s663 = sand.u32 %s439, 1
        %s664 = scalar_lea.sflag [#allocation5], %s663
        %s665 = sand.u32 %s439, 1
        %s666 = smul.addr %s665, 8
        %s667 = scalar_lea.vmem [#allocation4], %s666
        %p668 = scmp.lt.s32.totalorder %s33, 1
        %s669 = scalar_select %p668, %s33, 1
        %s670 = smul.addr %s669, 8
        %s671 = scalar_lea.vmem %s0, %s670
        %p672 = scmp.lt.s32.totalorder %s34, 1
        %s673 = scalar_select %p672, %s34, 1
        %s674 = scalar_lea.vmem %s1, %s673
        %p675 = scmp.lt.s32.totalorder %s34, 1
        %s676 = scalar_select %p675, %s34, 1
        %s677 = scalar_lea.vmem %s2, %s676
        %p678 = scmp.lt.s32.totalorder %s34, 1
        %s679 = scalar_select %p678, %s34, 1
        %s680 = smul.addr %s679, 4
        %s681 = smul.addr %s680, 4
        %s682 = scalar_lea.vmem %s3, %s681
        %p683 = scmp.lt.s32.totalorder %s34, 1
        %s684 = scalar_select %p683, %s34, 1
        %s685 = scalar_lea.vmem %s4, %s684
        %p686 = scmp.lt.s32.totalorder %s34, 1
        %s687 = scalar_select %p686, %s34, 1
        %s688 = smul.addr %s687, 4
        %s689 = smul.addr %s688, 4
        %s690 = scalar_lea.vmem %s5, %s689
        %p691 = scmp.lt.s32.totalorder %s34, 1
        %s692 = scalar_select %p691, %s34, 1
        %s693 = scalar_lea.vmem %s6, %s692
        %p694 = scmp.lt.s32.totalorder %s34, 1
        %s695 = scalar_select %p694, %s34, 1
        %s696 = smul.addr %s695, 4
        %s697 = smul.addr %s696, 4
        %s698 = scalar_lea.vmem %s7, %s697
        %p699 = scmp.lt.s32.totalorder %s34, 1
        %s700 = scalar_select %p699, %s34, 1
        %s701 = scalar_lea.vmem %s8, %s700
        %p702 = scmp.lt.s32.totalorder %s34, 1
        %s703 = scalar_select %p702, %s34, 1
        %s704 = scalar_lea.vmem %s9, %s703
        %p705 = scmp.lt.s32.totalorder %s34, 1
        %s706 = scalar_select %p705, %s34, 1
        %s707 = scalar_lea.vmem %s10, %s706
        %p708 = scmp.lt.s32.totalorder %s34, 1
        %s709 = scalar_select %p708, %s34, 1
        %s710 = scalar_lea.vmem %s11, %s709
        %p711 = scmp.lt.s32.totalorder %s34, 1
        %s712 = scalar_select %p711, %s34, 1
        %s713 = scalar_lea.vmem %s12, %s712
        %p714 = scmp.lt.s32.totalorder %s34, 1
        %s715 = scalar_select %p714, %s34, 1
        %s716 = smul.addr %s715, 8
        %s717 = smul.addr %s716, 4
        %s718 = scalar_lea.vmem %s13, %s717
        %p719 = scmp.lt.s32.totalorder %s34, 1
        %s720 = scalar_select %p719, %s34, 1
        %s721 = scalar_lea.vmem %s14, %s720
        %p723 = scmp.eq.s32.totalorder %s34, 0
        // Predicated region
        $region81: #{tpu_custom_call.1} parent=79 // pred_check
          %p724 = pneg %p723
        $region82: #{tpu_custom_call.1} parent=79 // pred_check_branch
          %726 = sbr.rel (%p724) target = $region84
        $region83: #{tpu_custom_call.1} parent=79 // pred_region
          %v727 = vld [vmem:[%s671] sm:$0xff]
          %vm728 = vcmask 261120
          %729 = vst.msk [vmem:[#allocation2] sm:$0xff] %vm728, %v727
        $region84: #{tpu_custom_call.1} parent=79 // pred_fallthru
          _
        %v730 = vld [vmem:[#allocation2] sm:$0xff]
        %vm731 = vcmask 261120
        %v732 = vsel %vm731, %v730, 0.0
        %733 = vadd.xlane.f32.xlu0 %v732
        %v734 = vpop.xlane.xlu0 %733
        %v735 = vrcp.pop 32.0
        %v736 = vmul.f32 %v734, %v735
        %v737 = vsub.f32 %v730, %v736
        %v738 = vmul.f32 %v737, %v737
        %v739 = vsel %vm731, %v738, 0.0
        %740 = vadd.xlane.f32.xlu0 %v739
        %v741 = vpop.xlane.xlu0 %740
        %v742 = vmul.f32 %v741, %v735
        %v743 = vadd.f32 %v742, 1e-05
        %v744 = vrsqrt.pop %v743
        %v745 = vmul.f32 %v737, %v744
        %v746 = vld [vmem:[%s674] sm:$0x1]
        %v748 = vlaneseq
        %v749 = vshrl.u32 %v748, 7
        %v750 = vsub.s32 0, %v749
        %v751 = vrot.slane %v746, %v750
        %v753 = vmul.f32 %v745, %v751
        %v754 = vld [vmem:[%s677] sm:$0x1]
        %v756 = vlaneseq
        %v757 = vshrl.u32 %v756, 7
        %v758 = vsub.s32 0, %v757
        %v759 = vrot.slane %v754, %v758
        %v761 = vadd.f32 %v753, %v759
        %v762 = vpack.c.bf16 %v761, %v761
        %v763 = vld [vmem:[%s682] sm:$0xf]
        %v764 = vld [vmem:[%s682 + $0x4] sm:$0xf]
        %v765 = vld [vmem:[%s682 + $0x8] sm:$0xf]
        %v766 = vld [vmem:[%s682 + $0xc] sm:$0xf]
        %v767 = vld [vmem:[%s685] sm:$0x1]
        %v769 = vlaneseq
        %v770 = vshrl.u32 %v769, 7
        %v771 = vsub.s32 0, %v770
        %v772 = vrot.slane %v767, %v771
        %v778 = vunpack.c.l.b16 %v763
        %v779 = vunpack.c.l.b16 %v764
        %v780 = vunpack.c.l.b16 %v765
        %v781 = vunpack.c.l.b16 %v766
        %v782 = vpack.c.b16 %v779, %v778
        %v783 = vpack.c.b16 %v781, %v780
        %v787 = vsel %vm731, %v762, 0
        %789 = vmatprep.subr.bf16.mxu0 0
        %790 = vmatpush1.bf16.msra.mxu0 0
        %791 = vmatprep.subr.bf16.mxu0 0
        %792 = vmatpush1.bf16.msra.mxu0 0
        %793 = vmatprep.subr.bf16.mxu0 0
        %794 = vmatpush1.bf16.msra.mxu0 0
        %795 = vmatprep.subr.bf16.mxu0 0
        %796 = vmatpush1.bf16.msra.mxu0 0
        %797 = vmatprep.subr.bf16.mxu0 0
        %798 = vmatpush1.bf16.msra.mxu0 0
        %799 = vmatprep.subr.bf16.mxu0 0
        %800 = vmatpush1.bf16.msra.mxu0 0
        %801 = vmatprep.subr.bf16.mxu0 0
        %802 = vmatpush1.bf16.msra.mxu0 %v783
        %803 = vmatprep.subr.bf16.mxu0 0
        %804 = vmatpush1.bf16.msra.mxu0 %v782
        %805 = vmatprep.subr.bf16.mxu0 0
        %806 = vmatpush2.bf16.msra.mxu0 0
        %807 = vmatprep.subr.bf16.mxu0 0
        %808 = vmatpush2.bf16.msra.mxu0 0
        %809 = vmatprep.subr.bf16.mxu0 0
        %810 = vmatpush2.bf16.msra.mxu0 0
        %811 = vmatprep.subr.bf16.mxu0 0
        %812 = vmatpush2.bf16.msra.mxu0 0
        %813 = vmatprep.subr.bf16.mxu0 0
        %814 = vmatpush2.bf16.msra.mxu0 0
        %815 = vmatprep.subr.bf16.mxu0 0
        %816 = vmatpush2.bf16.msra.mxu0 0
        %817 = vmatprep.subr.bf16.mxu0 0
        %818 = vmatpush2.bf16.msra.mxu0 0
        %819 = vmatprep.subr.bf16.mxu0 0
        %820 = vmatpush2.bf16.msra.mxu0 0
        %821 = vmatprep.mubr.bf16.mxu0 0
        %822 = vmatmul.mubr.bf16.gmra.mxu0 %v787
        %v823 = vpop.f32.mrf.mxu0
        %v824 = vadd.f32 %v772, %v823
        %v825 = vpop.f32.mrf.mxu0
        %v826 = vpop.f32.mrf.mxu0
        %v827 = vpop.f32.mrf.mxu0
        %828 = vdwg.mxu0
        %v829 = vxor.u32 %v824, 2147483648
        %v830 = vmul.f32 %v829, 1.442695
        %v831 = vpow.pop %v830
        %v832 = vadd.f32 %v831, 1.0
        %v833 = vrcp.pop %v832
        %v834 = vmul.f32 1.0, %v833
        %v835 = vmul.f32 %v824, %v834
        %v836 = vld [vmem:[%s690] sm:$0xf]
        %v837 = vld [vmem:[%s690 + $0x4] sm:$0xf]
        %v838 = vld [vmem:[%s690 + $0x8] sm:$0xf]
        %v839 = vld [vmem:[%s690 + $0xc] sm:$0xf]
        %v840 = vld [vmem:[%s693] sm:$0x1]
        %v842 = vlaneseq
        %v843 = vshrl.u32 %v842, 7
        %v844 = vsub.s32 0, %v843
        %v845 = vrot.slane %v840, %v844
        %v851 = vunpack.c.l.b16 %v836
        %v852 = vunpack.c.l.b16 %v837
        %v853 = vunpack.c.l.b16 %v838
        %v854 = vunpack.c.l.b16 %v839
        %v855 = vpack.c.b16 %v852, %v851
        %v856 = vpack.c.b16 %v854, %v853
        %859 = vmatprep.subr.bf16.mxu0 0
        %860 = vmatpush1.bf16.msra.mxu0 0
        %861 = vmatprep.subr.bf16.mxu0 0
        %862 = vmatpush1.bf16.msra.mxu0 0
        %863 = vmatprep.subr.bf16.mxu0 0
        %864 = vmatpush1.bf16.msra.mxu0 0
        %865 = vmatprep.subr.bf16.mxu0 0
        %866 = vmatpush1.bf16.msra.mxu0 0
        %867 = vmatprep.subr.bf16.mxu0 0
        %868 = vmatpush1.bf16.msra.mxu0 0
        %869 = vmatprep.subr.bf16.mxu0 0
        %870 = vmatpush1.bf16.msra.mxu0 0
        %871 = vmatprep.subr.bf16.mxu0 0
        %872 = vmatpush1.bf16.msra.mxu0 %v856
        %873 = vmatprep.subr.bf16.mxu0 0
        %874 = vmatpush1.bf16.msra.mxu0 %v855
        %875 = vmatprep.subr.bf16.mxu0 0
        %876 = vmatpush2.bf16.msra.mxu0 0
        %877 = vmatprep.subr.bf16.mxu0 0
        %878 = vmatpush2.bf16.msra.mxu0 0
        %879 = vmatprep.subr.bf16.mxu0 0
        %880 = vmatpush2.bf16.msra.mxu0 0
        %881 = vmatprep.subr.bf16.mxu0 0
        %882 = vmatpush2.bf16.msra.mxu0 0
        %883 = vmatprep.subr.bf16.mxu0 0
        %884 = vmatpush2.bf16.msra.mxu0 0
        %885 = vmatprep.subr.bf16.mxu0 0
        %886 = vmatpush2.bf16.msra.mxu0 0
        %887 = vmatprep.subr.bf16.mxu0 0
        %888 = vmatpush2.bf16.msra.mxu0 0
        %889 = vmatprep.subr.bf16.mxu0 0
        %890 = vmatpush2.bf16.msra.mxu0 0
        %891 = vmatprep.mubr.bf16.mxu0 0
        %892 = vmatmul.mubr.bf16.gmra.mxu0 %v787
        %v893 = vpop.f32.mrf.mxu0
        %v894 = vadd.f32 %v845, %v893
        %v895 = vpop.f32.mrf.mxu0
        %v896 = vpop.f32.mrf.mxu0
        %v897 = vpop.f32.mrf.mxu0
        %898 = vdwg.mxu0
        %v899 = vxor.u32 %v894, 2147483648
        %v900 = vmul.f32 %v899, 1.442695
        %v901 = vpow.pop %v900
        %v902 = vadd.f32 %v901, 1.0
        %v903 = vrcp.pop %v902
        %v904 = vmul.f32 1.0, %v903
        %v905 = vmul.f32 %v894, %v904
        %v906 = vld [vmem:[%s698] sm:$0xf]
        %v907 = vld [vmem:[%s698 + $0x4] sm:$0xf]
        %v908 = vld [vmem:[%s698 + $0x8] sm:$0xf]
        %v909 = vld [vmem:[%s698 + $0xc] sm:$0xf]
        %v910 = vld [vmem:[%s701] sm:$0x1]
        %v912 = vlaneseq
        %v913 = vshrl.u32 %v912, 7
        %v914 = vsub.s32 0, %v913
        %v915 = vrot.slane %v910, %v914
        %v921 = vunpack.c.l.b16 %v906
        %v922 = vunpack.c.l.b16 %v907
        %v923 = vunpack.c.l.b16 %v908
        %v924 = vunpack.c.l.b16 %v909
        %v925 = vpack.c.b16 %v922, %v921
        %v926 = vpack.c.b16 %v924, %v923
        %929 = vmatprep.subr.bf16.mxu0 0
        %930 = vmatpush1.bf16.msra.mxu0 0
        %931 = vmatprep.subr.bf16.mxu0 0
        %932 = vmatpush1.bf16.msra.mxu0 0
        %933 = vmatprep.subr.bf16.mxu0 0
        %934 = vmatpush1.bf16.msra.mxu0 0
        %935 = vmatprep.subr.bf16.mxu0 0
        %936 = vmatpush1.bf16.msra.mxu0 0
        %937 = vmatprep.subr.bf16.mxu0 0
        %938 = vmatpush1.bf16.msra.mxu0 0
        %939 = vmatprep.subr.bf16.mxu0 0
        %940 = vmatpush1.bf16.msra.mxu0 0
        %941 = vmatprep.subr.bf16.mxu0 0
        %942 = vmatpush1.bf16.msra.mxu0 %v926
        %943 = vmatprep.subr.bf16.mxu0 0
        %944 = vmatpush1.bf16.msra.mxu0 %v925
        %945 = vmatprep.subr.bf16.mxu0 0
        %946 = vmatpush2.bf16.msra.mxu0 0
        %947 = vmatprep.subr.bf16.mxu0 0
        %948 = vmatpush2.bf16.msra.mxu0 0
        %949 = vmatprep.subr.bf16.mxu0 0
        %950 = vmatpush2.bf16.msra.mxu0 0
        %951 = vmatprep.subr.bf16.mxu0 0
        %952 = vmatpush2.bf16.msra.mxu0 0
        %953 = vmatprep.subr.bf16.mxu0 0
        %954 = vmatpush2.bf16.msra.mxu0 0
        %955 = vmatprep.subr.bf16.mxu0 0
        %956 = vmatpush2.bf16.msra.mxu0 0
        %957 = vmatprep.subr.bf16.mxu0 0
        %958 = vmatpush2.bf16.msra.mxu0 0
        %959 = vmatprep.subr.bf16.mxu0 0
        %960 = vmatpush2.bf16.msra.mxu0 0
        %961 = vmatprep.mubr.bf16.mxu0 0
        %962 = vmatmul.mubr.bf16.gmra.mxu0 %v787
        %v963 = vpop.f32.mrf.mxu0
        %v964 = vadd.f32 %v915, %v963
        %v965 = vpop.f32.mrf.mxu0
        %v966 = vpop.f32.mrf.mxu0
        %v967 = vpop.f32.mrf.mxu0
        %968 = vdwg.mxu0
        %v969 = vxor.u32 %v964, 2147483648
        %v970 = vmul.f32 %v969, 1.442695
        %v971 = vpow.pop %v970
        %v972 = vadd.f32 %v971, 1.0
        %v973 = vrcp.pop %v972
        %v974 = vmul.f32 1.0, %v973
        %v975 = vmul.f32 %v964, %v974
        %v976 = vld [vmem:[%s704] sm:$0x1]
        %v978 = vlaneseq
        %v979 = vshrl.u32 %v978, 7
        %v980 = vsub.s32 0, %v979
        %v981 = vrot.slane %v976, %v980
        %v983 = vmul.f32 %v975, %v981
        %v984 = vld [vmem:[%s707] sm:$0x1]
        %v986 = vlaneseq
        %v987 = vshrl.u32 %v986, 7
        %v988 = vsub.s32 0, %v987
        %v989 = vrot.slane %v984, %v988
        %v991 = vadd.f32 %v983, %v989
        %v992 = vld [vmem:[%s710] sm:$0x1]
        %v994 = vlaneseq
        %v995 = vshrl.u32 %v994, 7
        %v996 = vsub.s32 0, %v995
        %v997 = vrot.slane %v992, %v996
        %v999 = vmul.f32 %v975, %v997
        %v1000 = vld [vmem:[%s713] sm:$0x1]
        %v1002 = vlaneseq
        %v1003 = vshrl.u32 %v1002, 7
        %v1004 = vsub.s32 0, %v1003
        %v1005 = vrot.slane %v1000, %v1004
        %v1007 = vadd.f32 %v999, %v1005
        %v1008 = vpack.c.bf16 %v991, %v991
        %v1009 = vpack.c.bf16 %v1007, %v1007
        %vm1010 = vcmask 130048
        %v1012 = vsel %vm1010, %v1008, 0
        %v1015 = vsel %vm1010, %v1009, 0
        %1017 = vmatprep.subr.bf16.mxu0 0
        %1018 = vmatpush1.bf16.xpose.msra.mxu0 0
        %1019 = vmatprep.subr.bf16.mxu0 0
        %1020 = vmatpush1.bf16.xpose.msra.mxu0 0
        %1021 = vmatprep.subr.bf16.mxu0 0
        %1022 = vmatpush1.bf16.xpose.msra.mxu0 0
        %1023 = vmatprep.subr.bf16.mxu0 0
        %1024 = vmatpush1.bf16.xpose.msra.mxu0 0
        %1025 = vmatprep.subr.bf16.mxu0 0
        %1026 = vmatpush1.bf16.xpose.msra.mxu0 0
        %1027 = vmatprep.subr.bf16.mxu0 0
        %1028 = vmatpush1.bf16.xpose.msra.mxu0 0
        %1029 = vmatprep.subr.bf16.mxu0 0
        %1030 = vmatpush1.bf16.xpose.msra.mxu0 0
        %1031 = vmatprep.subr.bf16.mxu0 0
        %1032 = vmatpush1.bf16.xpose.msra.mxu0 %v1015
        %1033 = vmatprep.subr.bf16.mxu0 0
        %1034 = vmatpush2.bf16.xpose.msra.mxu0 0
        %1035 = vmatprep.subr.bf16.mxu0 0
        %1036 = vmatpush2.bf16.xpose.msra.mxu0 0
        %1037 = vmatprep.subr.bf16.mxu0 0
        %1038 = vmatpush2.bf16.xpose.msra.mxu0 0
        %1039 = vmatprep.subr.bf16.mxu0 0
        %1040 = vmatpush2.bf16.xpose.msra.mxu0 0
        %1041 = vmatprep.subr.bf16.mxu0 0
        %1042 = vmatpush2.bf16.xpose.msra.mxu0 0
        %1043 = vmatprep.subr.bf16.mxu0 0
        %1044 = vmatpush2.bf16.xpose.msra.mxu0 0
        %1045 = vmatprep.subr.bf16.mxu0 0
        %1046 = vmatpush2.bf16.xpose.msra.mxu0 0
        %1047 = vmatprep.subr.bf16.mxu0 0
        %1048 = vmatpush2.bf16.xpose.msra.mxu0 0
        %1049 = vmatprep.mubr.bf16.mxu0 0
        %1050 = vmatmul.mubr.bf16.gmra.mxu0 %v1012
        %v1051 = vpop.f32.mrf.mxu0
        %v1052 = vadd.f32 0.0, %v1051
        %v1053 = vpop.f32.mrf.mxu0
        %v1054 = vpop.f32.mrf.mxu0
        %v1055 = vpop.f32.mrf.mxu0
        %1056 = vdwg.mxu0
        %v1057 = vmax.f32 %v1052, 0.0
        %v1058 = vmul.f32 %v1057, %v1057
        %v1059 = vpack.c.bf16 %v1058, %v1058
        %v1060 = vpack.c.bf16 %v835, %v835
        %vm1061 = vcmask 64512
        %v1063 = vsel %vm1061, %v1059, 0
        %vm1065 = vcmask 1043456
        %v1067 = vsel %vm1065, %v1060, 0
        %1069 = vmatprep.subr.bf16.mxu0 0
        %1070 = vmatpush1.bf16.msra.mxu0 0
        %1071 = vmatprep.subr.bf16.mxu0 0
        %1072 = vmatpush1.bf16.msra.mxu0 0
        %1073 = vmatprep.subr.bf16.mxu0 0
        %1074 = vmatpush1.bf16.msra.mxu0 0
        %1075 = vmatprep.subr.bf16.mxu0 0
        %1076 = vmatpush1.bf16.msra.mxu0 0
        %1077 = vmatprep.subr.bf16.mxu0 0
        %1078 = vmatpush1.bf16.msra.mxu0 0
        %1079 = vmatprep.subr.bf16.mxu0 0
        %1080 = vmatpush1.bf16.msra.mxu0 0
        %1081 = vmatprep.subr.bf16.mxu0 0
        %1082 = vmatpush1.bf16.msra.mxu0 0
        %1083 = vmatprep.subr.bf16.mxu0 0
        %1084 = vmatpush1.bf16.msra.mxu0 %v1067
        %1085 = vmatprep.subr.bf16.mxu0 0
        %1086 = vmatpush2.bf16.msra.mxu0 0
        %1087 = vmatprep.subr.bf16.mxu0 0
        %1088 = vmatpush2.bf16.msra.mxu0 0
        %1089 = vmatprep.subr.bf16.mxu0 0
        %1090 = vmatpush2.bf16.msra.mxu0 0
        %1091 = vmatprep.subr.bf16.mxu0 0
        %1092 = vmatpush2.bf16.msra.mxu0 0
        %1093 = vmatprep.subr.bf16.mxu0 0
        %1094 = vmatpush2.bf16.msra.mxu0 0
        %1095 = vmatprep.subr.bf16.mxu0 0
        %1096 = vmatpush2.bf16.msra.mxu0 0
        %1097 = vmatprep.subr.bf16.mxu0 0
        %1098 = vmatpush2.bf16.msra.mxu0 0
        %1099 = vmatprep.subr.bf16.mxu0 0
        %1100 = vmatpush2.bf16.msra.mxu0 0
        %1101 = vmatprep.mubr.bf16.mxu0 0
        %1102 = vmatmul.mubr.bf16.gmra.mxu0 %v1063
        %v1103 = vpop.f32.mrf.mxu0
        %v1104 = vadd.f32 0.0, %v1103
        %v1105 = vpop.f32.mrf.mxu0
        %v1106 = vpop.f32.mrf.mxu0
        %v1107 = vpop.f32.mrf.mxu0
        %1108 = vdwg.mxu0
        %v1109 = vmul.f32 %v1104, %v905
        %v1110 = vpack.c.bf16 %v1109, %v1109
        %v1111 = vld [vmem:[%s718] sm:$0xf]
        %v1112 = vld [vmem:[%s718 + $0x4] sm:$0xf]
        %v1113 = vld [vmem:[%s718 + $0x8] sm:$0xf]
        %v1114 = vld [vmem:[%s718 + $0xc] sm:$0xf]
        %v1115 = vld [vmem:[%s718 + $0x10] sm:$0xf]
        %v1116 = vld [vmem:[%s718 + $0x14] sm:$0xf]
        %v1117 = vld [vmem:[%s718 + $0x18] sm:$0xf]
        %v1118 = vld [vmem:[%s718 + $0x1c] sm:$0xf]
        %v1119 = vld [vmem:[%s721] sm:$0x1]
        %v1121 = vlaneseq
        %v1122 = vshrl.u32 %v1121, 7
        %v1123 = vsub.s32 0, %v1122
        %v1124 = vrot.slane %v1119, %v1123
        %v1134 = vunpack.c.l.b16 %v1111
        %v1135 = vunpack.c.l.b16 %v1112
        %v1136 = vunpack.c.l.b16 %v1113
        %v1137 = vunpack.c.l.b16 %v1114
        %v1138 = vunpack.c.l.b16 %v1115
        %v1139 = vunpack.c.l.b16 %v1116
        %v1140 = vunpack.c.l.b16 %v1117
        %v1141 = vunpack.c.l.b16 %v1118
        %v1142 = vpack.c.b16 %v1135, %v1134
        %v1143 = vpack.c.b16 %v1137, %v1136
        %v1144 = vpack.c.b16 %v1139, %v1138
        %v1145 = vpack.c.b16 %v1141, %v1140
        %vm1150 = vcmask 523264
        %v1152 = vsel %vm1150, %v1110, 0
        %1154 = vmatprep.subr.bf16.mxu0 0
        %1155 = vmatpush1.bf16.msra.mxu0 0
        %1156 = vmatprep.subr.bf16.mxu0 0
        %1157 = vmatpush1.bf16.msra.mxu0 0
        %1158 = vmatprep.subr.bf16.mxu0 0
        %1159 = vmatpush1.bf16.msra.mxu0 0
        %1160 = vmatprep.subr.bf16.mxu0 0
        %1161 = vmatpush1.bf16.msra.mxu0 0
        %1162 = vmatprep.subr.bf16.mxu0 0
        %1163 = vmatpush1.bf16.msra.mxu0 %v1145
        %1164 = vmatprep.subr.bf16.mxu0 0
        %1165 = vmatpush1.bf16.msra.mxu0 %v1144
        %1166 = vmatprep.subr.bf16.mxu0 0
        %1167 = vmatpush1.bf16.msra.mxu0 %v1143
        %1168 = vmatprep.subr.bf16.mxu0 0
        %1169 = vmatpush1.bf16.msra.mxu0 %v1142
        %1170 = vmatprep.subr.bf16.mxu0 0
        %1171 = vmatpush2.bf16.msra.mxu0 0
        %1172 = vmatprep.subr.bf16.mxu0 0
        %1173 = vmatpush2.bf16.msra.mxu0 0
        %1174 = vmatprep.subr.bf16.mxu0 0
        %1175 = vmatpush2.bf16.msra.mxu0 0
        %1176 = vmatprep.subr.bf16.mxu0 0
        %1177 = vmatpush2.bf16.msra.mxu0 0
        %1178 = vmatprep.subr.bf16.mxu0 0
        %1179 = vmatpush2.bf16.msra.mxu0 0
        %1180 = vmatprep.subr.bf16.mxu0 0
        %1181 = vmatpush2.bf16.msra.mxu0 0
        %1182 = vmatprep.subr.bf16.mxu0 0
        %1183 = vmatpush2.bf16.msra.mxu0 0
        %1184 = vmatprep.subr.bf16.mxu0 0
        %1185 = vmatpush2.bf16.msra.mxu0 0
        %1186 = vmatprep.mubr.bf16.mxu0 0
        %1187 = vmatmul.mubr.bf16.gmra.mxu0 %v1152
        %v1188 = vpop.f32.mrf.mxu0
        %v1189 = vadd.f32 %v1124, %v1188
        %v1190 = vpop.f32.mrf.mxu0
        %v1191 = vpop.f32.mrf.mxu0
        %v1192 = vpop.f32.mrf.mxu0
        %1193 = vdwg.mxu0
        %v1194 = vadd.f32 %v1189, %v730
        %p1195 = scmp.ge.s32.totalorder %s34, 1
        %p1196 = scmp.lt.s32.totalorder %s34, 0
        %s1197 = ssub.s32 0, %s34
        %s1198 = scalar_select %p1196, %s1197, %s34
        %s1199 = sand.u32 %s1198, 1
        %s1200 = ssub.s32 0, %s1199
        %s1201 = scalar_select %p1196, %s1200, %s1199
        %p1202 = scmp.ne.s32.totalorder %s1201, 0
        %p1203 = scmp.lt.s32.totalorder %s1201, 0
        %p1204 = pnand %p1203, %p1202
        %p1205 = pneg %p1204
        %s1206 = sadd.s32 %s1201, 2
        %s1207 = scalar_select %p1205, %s1206, %s1201
        %p1208 = scmp.eq.s32.totalorder %s1207, 0
        %p1209 = pnand %p1195, %p1208
        %p1210 = pneg %p1209
        %p1211 = scmp.ne.s32.totalorder %s34, 1
        %p1212 = pnand %p1210, %p1211
        %p1213 = pneg %p1212
        // Predicated region
        $region85: #{tpu_custom_call.1} parent=79 // pred_check
          _
        $region86: #{tpu_custom_call.1} parent=79 // pred_check_branch
          %1215 = sbr.rel (%p1212) target = $region88
        $region87: #{tpu_custom_call.1} parent=79 // pred_region
          %v1216 = vld [vmem:[#allocation3] sm:$0xff]
          %v1217 = vadd.f32 %v1194, %v1216
          %1218 = vst.msk [vmem:[#allocation2] sm:$0xff] %vm731, %v1217
          %1219 = vst.msk [vmem:[#allocation3] sm:$0xff] %vm731, %v1217
        $region88: #{tpu_custom_call.1} parent=79 // pred_fallthru
          _
        %p1220 = pneg %p1213
        // Predicated region
        $region89: #{tpu_custom_call.1} parent=79 // pred_check
          _
        $region90: #{tpu_custom_call.1} parent=79 // pred_check_branch
          %1222 = sbr.rel (%p1213) target = $region92
        $region91: #{tpu_custom_call.1} parent=79 // pred_region
          %1223 = vst.msk [vmem:[#allocation2] sm:$0xff] %vm731, %v1194
        $region92: #{tpu_custom_call.1} parent=79 // pred_fallthru
          _
        // Predicated region
        $region93: #{tpu_custom_call.1} parent=79 // pred_check
          %p1224 = pneg %p723
        $region94: #{tpu_custom_call.1} parent=79 // pred_check_branch
          %1226 = sbr.rel (%p1224) target = $region96
        $region95: #{tpu_custom_call.1} parent=79 // pred_region
          %1227 = vst.msk [vmem:[#allocation3] sm:$0xff] %vm731, %v1194
        $region96: #{tpu_custom_call.1} parent=79 // pred_fallthru
          _
        %p1228 = scmp.eq.s32.totalorder %s34, 1
        // Predicated region
        $region97: #{tpu_custom_call.1} parent=79 // pred_check
          %p1229 = pneg %p1228
        $region98: #{tpu_custom_call.1} parent=79 // pred_check_branch
          %1231 = sbr.rel (%p1229) target = $region100
        $region99: #{tpu_custom_call.1} parent=79 // pred_region
          %v1232 = vld [vmem:[#allocation2] sm:$0xff]
          %1233 = vst.msk [vmem:[%s667] sm:$0xff] %vm731, %v1232
        $region100: #{tpu_custom_call.1} parent=79 // pred_fallthru
          _
        %s1234 = sand.u32 %s439, 1
        %s1235 = scalar_lea.sflag [#allocation5], %s1234
        %s1236 = sand.u32 %s439, 1
        %s1237 = smul.addr %s1236, 8
        %s1238 = scalar_lea.vmem [#allocation4], %s1237
        // Predicated region
        $region101: #{tpu_custom_call.1} parent=79 // pred_check
          %p1239 = pneg %p449
        $region102: #{tpu_custom_call.1} parent=79 // pred_check_branch
          %1241 = sbr.rel (%p1239) target = $region104
        $region103: #{tpu_custom_call.1} parent=79 // pred_region
          %s1243 = ssub.s32 128, 128
          %1244 = vsyncadd %s1235, %s1243
          %s1245 = smul.addr %s33, 128
          %s1246 = scalar_lea.hbm %s15, %s1245
          %s1248 = sshll.u32 %s1238, 4
          %s1249 = int_to_ptr.vmem [resolvable:$true] %s1248
          %1251 = dma.vmem_to_hbm [thread:$0]  %s1249, 128, %s1246, %s1235
        $region104: #{tpu_custom_call.1} parent=79 // pred_fallthru
          _
      $region80: #{tpu_custom_call.1} parent=5 // pred_fallthru
        _
      %p1252 = scmp.le.s32.totalorder 2, %s24
      // Predicated region
      $region105: #{tpu_custom_call.1} parent=5 // pred_check
        %p1253 = pneg %p1252
      $region106: #{tpu_custom_call.1} parent=5 // pred_check_branch
        %1255 = sbr.rel (%p1253) target = $region108
      $region107: #{tpu_custom_call.1} parent=5 // pred_region
        %s1256 = ssub.s32 %s24, 2
        // Predicated region
        $region109: #{tpu_custom_call.1} parent=107 // pred_check
          %p1257 = pneg %p455
        $region110: #{tpu_custom_call.1} parent=107 // pred_check_branch
          %1259 = sbr.rel (%p1257) target = $region112
        $region111: #{tpu_custom_call.1} parent=107 // pred_region
          %s1260 = sand.u32 %s440, 1
          %s1261 = scalar_lea.sflag [#allocation5], %s1260
          %s1262 = sand.u32 %s440, 1
          %s1263 = smul.addr %s1262, 8
          %s1264 = scalar_lea.vmem [#allocation4], %s1263
          %1265 = dma.done %s1261, 128
        $region112: #{tpu_custom_call.1} parent=107 // pred_fallthru
          _
      $region108: #{tpu_custom_call.1} parent=5 // pred_fallthru
        _
    $region6: #{tpu_custom_call.1} parent=1 // loop_footer
      %s28 = sadd.s32 1, %s24
    $region7: #{tpu_custom_call.1} parent=1 // loop_footer_branch
      %23 = sbr.rel target = $region3
    $region8: #{tpu_custom_call.1} parent=1 // loop_exit
      _
    %1266 = vsyncpa [#allocation5], 1
    %s1267 = scalar_lea.sflag [#allocation5], 1
    %1268 = vsyncpa %s1267, 1

</llo_original>
